<compile_context>
chip_gen: v6e
topology: v6e:2x2x1
jax: 0.10.0
libtpu: 0.0.40
codegen_flags: <defaults>
</compile_context>

<pallas_src>
import functools
import math

import jax
import jax.numpy as jnp
from jax.experimental import pallas as pl
from jax.experimental.pallas import tpu as pltpu


def _round_up(x, m):
    return ((x + m - 1) // m) * m


def _pad2d(x, rows, cols):
    r, c = x.shape
    if r == rows and c == cols:
        return x
    return jnp.pad(x, ((0, rows - r), (0, cols - c)))


def _pick_tile(total, target, unit):
    """Largest multiple of `unit` that divides `total` and is <= target."""
    t = max(unit, (min(target, total) // unit) * unit)
    while total % t:
        t -= unit
    return t


def _detect_chip():
    """Generation-specific knobs (VMEM limit, tile targets, attention options)."""
    try:
        kind = jax.devices()[0].device_kind.lower()
    except Exception:
        kind = ""
    if "v7" in kind or "7x" in kind:
        # 64 MiB physical VMEM per TC -> leave headroom for Mosaic scratch.
        return {"vmem": 48 * 2**20, "tiles": (256, 512, 512),
                "score_budget": 16 * 2**20, "exp_dtype": jnp.bfloat16}
    if "v6" in kind:
        return {"vmem": 100 * 2**20, "tiles": (512, 1024, 1024),
                "score_budget": 48 * 2**20, "exp_dtype": jnp.bfloat16}
    if "v5" in kind or "v4" in kind:
        # 128 MiB VMEM; keep f32 exp (no bf16 EUP on v5e).
        return {"vmem": 100 * 2**20, "tiles": (512, 1024, 1024),
                "score_budget": 48 * 2**20, "exp_dtype": jnp.float32}
    return {"vmem": 48 * 2**20, "tiles": (256, 512, 512),
            "score_budget": 16 * 2**20, "exp_dtype": jnp.float32}


_CHIP = _detect_chip()


# ----------------------------------------------------------------------------
# Fused linear kernel:  Y = act(X @ W + b) [+ residual] [-> layernorm]
# ----------------------------------------------------------------------------
def _linear_kernel(*refs, activation, has_residual, fuse_ln, n_real, eps):
    x_ref, w_ref, b_ref = refs[0], refs[1], refs[2]
    p = 3
    res_ref = g_ref = be_ref = None
    if has_residual:
        res_ref = refs[p]
        p += 1
    if fuse_ln:
        g_ref, be_ref = refs[p], refs[p + 1]
        p += 2
    o_ref, acc_ref = refs[p], refs[p + 1]

    k = pl.program_id(2)

    @pl.when(k == 0)
    def _():
        acc_ref[...] = jnp.zeros_like(acc_ref)

    # bf16 x bf16 -> f32 accumulation on the MXU.
    acc_ref[...] += jnp.dot(x_ref[...], w_ref[...],
                            preferred_element_type=jnp.float32)

    @pl.when(k == pl.num_programs(2) - 1)
    def _():
        y = acc_ref[...] + b_ref[...]
        if activation == "gelu":
            # TODO(synk): tanh-approx GELU (reference BERT uses erf-based gelu).
            c = math.sqrt(2.0 / math.pi)
            y = 0.5 * y * (1.0 + jnp.tanh(c * (y + 0.044715 * y * y * y)))
        elif activation == "tanh":
            y = jnp.tanh(y)
        if has_residual:
            y = y + res_ref[...].astype(jnp.float32)
        if fuse_ln:
            tn = y.shape[-1]
            if n_real == tn:
                mu = jnp.mean(y, axis=-1, keepdims=True)
                var = jnp.mean((y - mu) ** 2, axis=-1, keepdims=True)
            else:
                # Lane padding beyond n_real must not perturb mean/variance.
                mask = jax.lax.broadcasted_iota(jnp.int32, y.shape, 1) < n_real
                ym = jnp.where(mask, y, 0.0)
                mu = jnp.sum(ym, axis=-1, keepdims=True) / n_real
                d = jnp.where(mask, y - mu, 0.0)
                var = jnp.sum(d * d, axis=-1, keepdims=True) / n_real
            y = (y - mu) * jax.lax.rsqrt(var + eps)
            y = y * g_ref[...] + be_ref[...]
        o_ref[...] = y.astype(o_ref.dtype)


def linear(x, w, b, *, activation="none", residual=None,
           ln_gamma=None, ln_beta=None, ln_eps=1e-12, n_real=None,
           out_dtype=jnp.bfloat16):
    """Y = act(X @ W + b) [+ residual] [-> layernorm over N].

    All operands are pre-padded / pre-cast (prepare_params / upstream kernels):
      x: [M, K] bf16 (M % 8 == 0, K % 128 == 0), w: [K, N] bf16 (N % 128 == 0),
      b / ln_gamma / ln_beta: [1, N] f32, residual: [M, N] bf16.
    Returns [M, N] out_dtype; lane-padding columns stay zero.
    """
    M, K = x.shape
    Kw, N = w.shape
    assert Kw == K and M % 8 == 0 and K % 128 == 0 and N % 128 == 0
    fuse_ln = ln_gamma is not None
    has_residual = residual is not None
    if n_real is None:
        n_real = N

    tm_t, tk_t, tn_t = _CHIP["tiles"]
    tm = _pick_tile(M, tm_t, 8)
    tk = _pick_tile(K, tk_t, 128)
    if fuse_ln:
        tn = N                              # layernorm needs the full row in one tile
        # Keep >= 2 row blocks so both v7x TensorCores get work when the N grid is 1.
        if M // tm < 2 <= M // 8:
            tm = _pick_tile(M, max(8, (M // 2) // 8 * 8), 8)
    else:
        tn = _pick_tile(N, tn_t, 128)

    inputs = [x, w, b]
    in_specs = [
        pl.BlockSpec((tm, tk), lambda i, j, k: (i, k)),
        pl.BlockSpec((tk, tn), lambda i, j, k: (k, j)),
        pl.BlockSpec((1, tn), lambda i, j, k: (0, j)),
    ]
    if has_residual:
        inputs.append(residual)
        in_specs.append(pl.BlockSpec((tm, tn), lambda i, j, k: (i, j)))
    if fuse_ln:
        inputs += [ln_gamma, ln_beta]
        in_specs += [pl.BlockSpec((1, tn), lambda i, j, k: (0, j)),
                     pl.BlockSpec((1, tn), lambda i, j, k: (0, j))]

    return pl.pallas_call(
        functools.partial(_linear_kernel, activation=activation,
                          has_residual=has_residual, fuse_ln=fuse_ln,
                          n_real=n_real, eps=ln_eps),
        out_shape=jax.ShapeDtypeStruct((M, N), out_dtype),
        grid=(M // tm, N // tn, K // tk),
        in_specs=in_specs,
        out_specs=pl.BlockSpec((tm, tn), lambda i, j, k: (i, j)),
        scratch_shapes=[pltpu.VMEM((tm, tn), jnp.float32)],
        compiler_params=pltpu.CompilerParams(
            dimension_semantics=("parallel", "parallel", "arbitrary"),
            vmem_limit_bytes=_CHIP["vmem"]),
    )(*inputs)


# ----------------------------------------------------------------------------
# Row-tiled layernorm (used only for the embedding layernorm)
# ----------------------------------------------------------------------------
def _layernorm_kernel(x_ref, g_ref, b_ref, o_ref, *, eps):
    x = x_ref[...].astype(jnp.float32)
    mu = jnp.mean(x, axis=-1, keepdims=True)
    var = jnp.mean((x - mu) ** 2, axis=-1, keepdims=True)
    y = (x - mu) * jax.lax.rsqrt(var + eps)
    o_ref[...] = (y * g_ref[...] + b_ref[...]).astype(o_ref.dtype)


def layernorm(x, gamma, beta, eps=1e-12):
    """x: [M, H] f32 (M % 8 == 0), gamma/beta: [1, H] f32 -> [M, H] bf16."""
    M, H = x.shape
    tm = _pick_tile(M, 512, 8)
    return pl.pallas_call(
        functools.partial(_layernorm_kernel, eps=eps),
        out_shape=jax.ShapeDtypeStruct((M, H), jnp.bfloat16),
        grid=(M // tm,),
        in_specs=[pl.BlockSpec((tm, H), lambda i: (i, 0)),
                  pl.BlockSpec((1, H), lambda i: (0, 0)),
                  pl.BlockSpec((1, H), lambda i: (0, 0))],
        out_specs=pl.BlockSpec((tm, H), lambda i: (i, 0)),
        compiler_params=pltpu.CompilerParams(
            dimension_semantics=("parallel",),
            vmem_limit_bytes=_CHIP["vmem"]),
    )(x, gamma, beta)


# ----------------------------------------------------------------------------
# Multi-head attention reading Q/K/V straight from the fused QKV projection
# ----------------------------------------------------------------------------
def _attn_one_head(q, k, v, mask, exp_dtype):
    """q,k,v: (S, D) bf16; mask: (1, S) f32 additive. 1/sqrt(D) folded into q."""
    s = jax.lax.dot_general(q, k, (((1,), (1,)), ((), ())),
                            preferred_element_type=jnp.float32)            # (S, S)
    s = s + mask
    s = s - jnp.max(s, axis=-1, keepdims=True)
    p = jnp.exp(s.astype(exp_dtype))                 # EUP; bf16 on v6e/v7x, f32 on v5e
    denom = jnp.sum(p.astype(jnp.float32), axis=-1, keepdims=True)
    ctx = jax.lax.dot_general(p.astype(jnp.bfloat16), v, (((1,), (0,)), ((), ())),
                              preferred_element_type=jnp.float32)          # (S, D)
    return ctx * pl.reciprocal(denom, approx=True)


def _attention_block_kernel(q_ref, k_ref, v_ref, m_ref, o_ref, *, hb, D, exp_dtype):
    """hb heads per step; q/k/v blocks are (S, hb*D) column slabs of the fused QKV."""
    q = q_ref[...]
    k = k_ref[...]
    v = v_ref[...]
    mask = m_ref[0]
    outs = [_attn_one_head(q[:, h * D:(h + 1) * D], k[:, h * D:(h + 1) * D],
                           v[:, h * D:(h + 1) * D], mask, exp_dtype)
            for h in range(hb)]
    o_ref[...] = jnp.concatenate(outs, axis=-1).astype(o_ref.dtype)        # lane-dense


def _attention_full_kernel(qkv_ref, m_ref, o_ref, *, n_heads, D, H, exp_dtype):
    """Fallback for H not lane-aligned: one batch per step, all heads unrolled."""
    qkv = qkv_ref[...]
    mask = m_ref[0]
    outs = [_attn_one_head(qkv[:, h * D:(h + 1) * D],
                           qkv[:, H + h * D:H + (h + 1) * D],
                           qkv[:, 2 * H + h * D:2 * H + (h + 1) * D],
                           mask, exp_dtype)
            for h in range(n_heads)]
    pad = o_ref.shape[-1] - n_heads * D
    if pad:
        outs.append(jnp.zeros((qkv.shape[0], pad), jnp.float32))
    o_ref[...] = jnp.concatenate(outs, axis=-1).astype(o_ref.dtype)


def multihead_attention(qkv, attn_mask, *, B, S, H, n_heads):
    """qkv: [B*S, >=3H] bf16 (fused QKV, lane-padded); attn_mask: [B, 1, S] f32.

    Reads per-head column slabs directly from the fused projection (no JAX-side
    head split / transpose) and writes merged context as [B*S, Hp] bf16.
    """
    M, qkv_w = qkv.shape
    D = H // n_heads
    Hp = _round_up(H, 128)
    assert M == B * S and S % 8 == 0
    exp_dtype = _CHIP["exp_dtype"]

    aligned = [c for c in range(1, n_heads + 1)
               if n_heads % c == 0 and (c * D) % 128 == 0]
    if aligned:
        # Lane-aligned head blocks: three column-slab BlockSpecs on the same qkv array.
        within = [c for c in aligned if 3 * c * S * S * 4 <= _CHIP["score_budget"]]
        hb = max(within) if within else min(aligned)
        nb = n_heads // hb
        W = hb * D
        return pl.pallas_call(
            functools.partial(_attention_block_kernel, hb=hb, D=D,
                              exp_dtype=exp_dtype),
            out_shape=jax.ShapeDtypeStruct((M, Hp), jnp.bfloat16),
            grid=(B, nb),
            in_specs=[
                pl.BlockSpec((S, W), lambda b, g: (b, g)),              # Q slab
                pl.BlockSpec((S, W), lambda b, g: (b, nb + g)),         # K slab
                pl.BlockSpec((S, W), lambda b, g: (b, 2 * nb + g)),     # V slab
                pl.BlockSpec((1, 1, S), lambda b, g: (b, 0, 0)),        # mask
            ],
            out_specs=pl.BlockSpec((S, W), lambda b, g: (b, g)),
            compiler_params=pltpu.CompilerParams(
                dimension_semantics=("parallel", "parallel"),
                vmem_limit_bytes=_CHIP["vmem"]),
        )(qkv, qkv, qkv, attn_mask)

    # Small-H fallback (e.g. the unit-test config): full QKV row slab per batch.
    return pl.pallas_call(
        functools.partial(_attention_full_kernel, n_heads=n_heads, D=D, H=H,
                          exp_dtype=exp_dtype),
        out_shape=jax.ShapeDtypeStruct((M, Hp), jnp.bfloat16),
        grid=(B,),
        in_specs=[
            pl.BlockSpec((S, qkv_w), lambda b: (b, 0)),
            pl.BlockSpec((1, 1, S), lambda b: (b, 0, 0)),
        ],
        out_specs=pl.BlockSpec((S, Hp), lambda b: (b, 0)),
        compiler_params=pltpu.CompilerParams(
            dimension_semantics=("parallel",),
            vmem_limit_bytes=_CHIP["vmem"]),
    )(qkv, attn_mask)


# ----------------------------------------------------------------------------
# Deterministic parameter construction (shapes implied by BertConfig)
# ----------------------------------------------------------------------------
class BertConfig:
    vocab_size = 100
    hidden_size = 32
    num_hidden_layers = 2
    num_attention_heads = 2
    intermediate_size = 64
    max_position_embeddings = 8
    type_vocab_size = 2
    hidden_dropout_prob = 0.1
    initializer_range = 0.02


def init_params(key, cfg, label_num):
    H, I = cfg.hidden_size, cfg.intermediate_size
    r = cfg.initializer_range

    def nrm(k, shape):
        return jax.random.normal(k, shape, jnp.float32) * r

    keys = iter(jax.random.split(key, 64 + 16 * cfg.num_hidden_layers))
    p = {
        "word_emb": nrm(next(keys), (cfg.vocab_size, H)),
        "pos_emb": nrm(next(keys), (cfg.max_position_embeddings, H)),
        "seg_emb": nrm(next(keys), (cfg.type_vocab_size, H)),
        "emb_ln_g": jnp.ones((H,), jnp.float32),
        "emb_ln_b": jnp.zeros((H,), jnp.float32),
        "layers": [],
        "pool_w": nrm(next(keys), (H, H)),
        "pool_b": jnp.zeros((H,), jnp.float32),
        # classifier.weight = torch.fmod(randn, initializer_range); bias = zeros
        "cls_w": jnp.fmod(jax.random.normal(next(keys), (H, label_num), jnp.float32), r),
        "cls_b": jnp.zeros((label_num,), jnp.float32),
    }
    for _ in range(cfg.num_hidden_layers):
        wq, wk, wv = nrm(next(keys), (H, H)), nrm(next(keys), (H, H)), nrm(next(keys), (H, H))
        layer = {
            "wqkv": jnp.concatenate([wq, wk, wv], axis=1),          # fused [H, 3H]
            "bqkv": jnp.zeros((3 * H,), jnp.float32),
            "wo": nrm(next(keys), (H, H)), "bo": jnp.zeros((H,), jnp.float32),
            "ln1_g": jnp.ones((H,), jnp.float32), "ln1_b": jnp.zeros((H,), jnp.float32),
            "wi": nrm(next(keys), (H, I)), "bi": jnp.zeros((I,), jnp.float32),
            "wf": nrm(next(keys), (I, H)), "bf": jnp.zeros((H,), jnp.float32),
            "ln2_g": jnp.ones((H,), jnp.float32), "ln2_b": jnp.zeros((H,), jnp.float32),
        }
        p["layers"].append(layer)
    return p


def prepare_params(params, cfg):
    """One-time (outside jit) weight prep: pad to lane-aligned shapes, cast MXU
    operands to bf16 and fold the 1/sqrt(D) attention scale into the Q columns."""
    H = cfg.hidden_size
    D = H // cfg.num_attention_heads
    scale = 1.0 / math.sqrt(D)

    def w_prep(w):
        K, N = w.shape
        return _pad2d(w, _round_up(K, 128), _round_up(N, 128)).astype(jnp.bfloat16)

    def v_prep(v):
        N = v.shape[0]
        return jnp.pad(v, (0, _round_up(N, 128) - N)).reshape(1, -1).astype(jnp.float32)

    out = {
        "word_emb": params["word_emb"],
        "pos_emb": params["pos_emb"],
        "seg_emb": params["seg_emb"],
        "emb_ln_g": params["emb_ln_g"].reshape(1, H).astype(jnp.float32),
        "emb_ln_b": params["emb_ln_b"].reshape(1, H).astype(jnp.float32),
        "pool_w": w_prep(params["pool_w"]), "pool_b": v_prep(params["pool_b"]),
        "cls_w": w_prep(params["cls_w"]), "cls_b": v_prep(params["cls_b"]),
        "layers": [],
    }
    for lp in params["layers"]:
        wqkv = lp["wqkv"].at[:, :H].multiply(scale)     # fold attention scale into Q
        bqkv = lp["bqkv"].at[:H].multiply(scale)
        out["layers"].append({
            "wqkv": w_prep(wqkv), "bqkv": v_prep(bqkv),
            "wo": w_prep(lp["wo"]), "bo": v_prep(lp["bo"]),
            "ln1_g": v_prep(lp["ln1_g"]), "ln1_b": v_prep(lp["ln1_b"]),
            "wi": w_prep(lp["wi"]), "bi": v_prep(lp["bi"]),
            "wf": w_prep(lp["wf"]), "bf": v_prep(lp["bf"]),
            "ln2_g": v_prep(lp["ln2_g"]), "ln2_b": v_prep(lp["ln2_b"]),
        })
    return out


# ----------------------------------------------------------------------------
# Forward pass (BertModel -> pooled output -> dropout -> classifier)
# ----------------------------------------------------------------------------
def classifier_forward(params, input_ids, segment_ids, input_mask, *, cfg, label_num):
    B, S = input_ids.shape
    H = cfg.hidden_size
    nh = cfg.num_attention_heads
    Hp = _round_up(H, 128)
    assert S % 8 == 0, "sequence length must be a multiple of 8"

    # --- embeddings (gathers are glue; LN is a Pallas kernel) ---
    pos_ids = jnp.arange(S, dtype=jnp.int32)
    emb = (jnp.take(params["word_emb"], input_ids, axis=0)
           + jnp.take(params["pos_emb"], pos_ids, axis=0)[None, :, :]
           + jnp.take(params["seg_emb"], segment_ids, axis=0))         # [B,S,H] f32
    x = layernorm(emb.reshape(B * S, H), params["emb_ln_g"], params["emb_ln_b"])
    if Hp != H:
        # Pad the lane dim once; activations stay [B*S, Hp] bf16 across the encoder.
        x = jnp.pad(x, ((0, 0), (0, Hp - H)))
    # TODO(synk): embedding dropout omitted (eval-mode identity).

    # --- extended attention mask: (1 - mask) * -10000, shaped [B, 1, S] ---
    attn_mask = ((1.0 - input_mask.astype(jnp.float32)) * -10000.0).reshape(B, 1, S)

    # --- transformer encoder (activations stay padded bf16 [B*S, Hp]) ---
    for lp in params["layers"]:
        xf = x
        qkv = linear(xf, lp["wqkv"], lp["bqkv"])                        # [B*S, 3H(pad)]
        ctx = multihead_attention(qkv, attn_mask, B=B, S=S, H=H, n_heads=nh)
        # Attention out-projection + bias + residual + LN1, fused epilogue.
        x = linear(ctx, lp["wo"], lp["bo"], residual=xf,
                   ln_gamma=lp["ln1_g"], ln_beta=lp["ln1_b"], n_real=H)
        # FFN: intermediate (gelu) then output + bias + residual + LN2, fused.
        inter = linear(x, lp["wi"], lp["bi"], activation="gelu")
        x = linear(inter, lp["wf"], lp["bf"], residual=x,
                   ln_gamma=lp["ln2_g"], ln_beta=lp["ln2_b"], n_real=H)

    # --- pooler: first token -> dense -> tanh ---
    first = jnp.take(x, jnp.arange(B) * S, axis=0)                      # [B, Hp] bf16
    Bp = _round_up(B, 8)
    if Bp != B:
        first = jnp.pad(first, ((0, Bp - B), (0, 0)))
    pooled = linear(first, params["pool_w"], params["pool_b"], activation="tanh")

    # --- dropout (eval mode => identity) + classifier (lane-padded, sliced) ---
    # TODO(synk): nn.Dropout is identity at inference; training-mode RNG dropout not modeled.
    logits = linear(pooled, params["cls_w"], params["cls_b"], out_dtype=jnp.float32)
    return logits[:B, :label_num]


# ----------------------------------------------------------------------------
if __name__ == "__main__":
    cfg = BertConfig()
    label_num = 3
    B, S = 2, 8

    key = jax.random.PRNGKey(0)
    kp, kid, kseg = jax.random.split(key, 3)
    params = init_params(kp, cfg, label_num)
    # One-time weight prep (pad / bf16-cast / scale fold) OUTSIDE the jitted forward.
    prepped = prepare_params(params, cfg)

    input_ids = jax.random.randint(kid, (B, S), 0, cfg.vocab_size, dtype=jnp.int32)
    segment_ids = jax.random.randint(kseg, (B, S), 0, cfg.type_vocab_size, dtype=jnp.int32)
    input_mask = jnp.ones((B, S), dtype=jnp.int32)

    fwd = jax.jit(functools.partial(classifier_forward, cfg=cfg, label_num=label_num))
    logits = fwd(prepped, input_ids, segment_ids, input_mask)
    jax.block_until_ready(logits)
    assert logits.shape == (B, label_num)
    assert bool(jnp.all(jnp.isfinite(logits)))
    print("KERNEL_OK")
</pallas_src>

<mosaic_0001>
module attributes {stable_mosaic.version = 11 : i64} {
  func.func @_layernorm_kernel(%arg0: i32, %arg1: memref<16x32xf32, #tpu.memory_space<vmem>>, %arg2: memref<1x32xf32, #tpu.memory_space<vmem>>, %arg3: memref<1x32xf32, #tpu.memory_space<vmem>>, %arg4: memref<16x32xbf16, #tpu.memory_space<vmem>>) attributes {dimension_semantics = [#tpu.dimension_semantics<parallel>], iteration_bounds = array<i64: 1>, scalar_prefetch = 0 : i64, scratch_operands = 0 : i64, tpu.core_type = #tpu.core_type<tc>, window_params = [{transform_indices = @transform_0, window_bounds = array<i64: 16, 32>}, {pipeline_mode = #tpu.pipeline_mode<synchronous>, transform_indices = @transform_1, window_bounds = array<i64: 1, 32>}, {pipeline_mode = #tpu.pipeline_mode<synchronous>, transform_indices = @transform_2, window_bounds = array<i64: 1, 32>}, {transform_indices = @transform_3, window_bounds = array<i64: 16, 32>}]} {
    %c0 = arith.constant 0 : index
    %c0_0 = arith.constant 0 : index
    %0 = vector.load %arg1[%c0, %c0_0] : memref<16x32xf32, #tpu.memory_space<vmem>>, vector<16x32xf32>
    %cst = arith.constant dense<0.000000e+00> : vector<16xf32>
    %1 = vector.multi_reduction <add>, %0, %cst [1] : vector<16x32xf32> to vector<16xf32>
    %2 = vector.shape_cast %1 : vector<16xf32> to vector<16x1xf32>
    %cst_1 = arith.constant 3.200000e+01 : f32
    %3 = vector.broadcast %cst_1 : f32 to vector<16x1xf32>
    %4 = arith.divf %2, %3 : vector<16x1xf32>
    %5 = vector.broadcast %4 : vector<16x1xf32> to vector<16x32xf32>
    %6 = arith.subf %0, %5 : vector<16x32xf32>
    %7 = arith.mulf %6, %6 : vector<16x32xf32>
    %cst_2 = arith.constant dense<0.000000e+00> : vector<16xf32>
    %8 = vector.multi_reduction <add>, %7, %cst_2 [1] : vector<16x32xf32> to vector<16xf32>
    %9 = vector.shape_cast %8 : vector<16xf32> to vector<16x1xf32>
    %cst_3 = arith.constant 3.200000e+01 : f32
    %10 = vector.broadcast %cst_3 : f32 to vector<16x1xf32>
    %11 = arith.divf %9, %10 : vector<16x1xf32>
    %12 = vector.broadcast %4 : vector<16x1xf32> to vector<16x32xf32>
    %13 = arith.subf %0, %12 : vector<16x32xf32>
    %cst_4 = arith.constant 9.99999996E-13 : f32
    %14 = vector.broadcast %cst_4 : f32 to vector<16x1xf32>
    %15 = arith.addf %11, %14 : vector<16x1xf32>
    %16 = math.rsqrt %15 : vector<16x1xf32>
    %17 = vector.broadcast %16 : vector<16x1xf32> to vector<16x32xf32>
    %18 = arith.mulf %13, %17 : vector<16x32xf32>
    %c0_5 = arith.constant 0 : index
    %c0_6 = arith.constant 0 : index
    %19 = vector.load %arg2[%c0_5, %c0_6] : memref<1x32xf32, #tpu.memory_space<vmem>>, vector<1x32xf32>
    %20 = vector.broadcast %19 : vector<1x32xf32> to vector<16x32xf32>
    %21 = arith.mulf %18, %20 : vector<16x32xf32>
    %c0_7 = arith.constant 0 : index
    %c0_8 = arith.constant 0 : index
    %22 = vector.load %arg3[%c0_7, %c0_8] : memref<1x32xf32, #tpu.memory_space<vmem>>, vector<1x32xf32>
    %23 = vector.broadcast %22 : vector<1x32xf32> to vector<16x32xf32>
    %24 = arith.addf %21, %23 : vector<16x32xf32>
    %25 = arith.truncf %24 : vector<16x32xf32> to vector<16x32xbf16>
    %c0_9 = arith.constant 0 : index
    %c0_10 = arith.constant 0 : index
    %26 = vector.load %arg4[%c0_9, %c0_10] : memref<16x32xbf16, #tpu.memory_space<vmem>>, vector<16x32xbf16>
    tpu.vector_store %arg4[%c0_9, %c0_10], %25 {strides = array<i32>} : memref<16x32xbf16, #tpu.memory_space<vmem>>, vector<16x32xbf16>,
    return
  }
  func.func @transform_0(%arg0: i32) -> (i32, i32) {
    %c0_i32 = arith.constant 0 : i32
    %c0_i32_0 = arith.constant 0 : i32
    return %arg0, %c0_i32 : i32, i32
  }
  func.func @transform_1(%arg0: i32) -> (i32, i32) {
    %c0_i32 = arith.constant 0 : i32
    %c0_i32_0 = arith.constant 0 : i32
    %c0_i32_1 = arith.constant 0 : i32
    return %c0_i32, %c0_i32_0 : i32, i32
  }
  func.func @transform_2(%arg0: i32) -> (i32, i32) {
    %c0_i32 = arith.constant 0 : i32
    %c0_i32_0 = arith.constant 0 : i32
    %c0_i32_1 = arith.constant 0 : i32
    return %c0_i32, %c0_i32_0 : i32, i32
  }
  func.func @transform_3(%arg0: i32) -> (i32, i32) {
    %c0_i32 = arith.constant 0 : i32
    %c0_i32_0 = arith.constant 0 : i32
    return %arg0, %c0_i32 : i32, i32
  }
}

module attributes {stable_mosaic.version = 11 : i64} {
  func.func @_linear_kernel(%arg0: i32, %arg1: i32, %arg2: i32, %arg3: memref<16x128xbf16, #tpu.memory_space<vmem>>, %arg4: memref<128x128xbf16, #tpu.memory_space<vmem>>, %arg5: memref<1x128xf32, #tpu.memory_space<vmem>>, %arg6: memref<16x128xbf16, #tpu.memory_space<vmem>>, %arg7: memref<16x128xf32, #tpu.memory_space<vmem>>) attributes {dimension_semantics = [#tpu.dimension_semantics<parallel>, #tpu.dimension_semantics<parallel>, #tpu.dimension_semantics<arbitrary>], iteration_bounds = array<i64: 1, 1, 1>, scalar_prefetch = 0 : i64, scratch_operands = 1 : i64, tpu.core_type = #tpu.core_type<tc>, window_params = [{transform_indices = @transform_0, window_bounds = array<i64: 16, 128>}, {transform_indices = @transform_1, window_bounds = array<i64: 128, 128>}, {transform_indices = @transform_2, window_bounds = array<i64: 1, 128>}, {transform_indices = @transform_3, window_bounds = array<i64: 16, 128>}]} {
    %c0_i32 = arith.constant 0 : i32
    %0 = arith.cmpi eq, %arg2, %c0_i32 : i32
    %1 = arith.extui %0 : i1 to i32
    %c0_i32_0 = arith.constant 0 : i32
    %2 = arith.cmpi ne, %1, %c0_i32_0 : i32
    scf.if %2 {
      %cst_10 = arith.constant 0.000000e+00 : f32
      %12 = vector.broadcast %cst_10 : f32 to vector<16x128xf32>
      %c0_11 = arith.constant 0 : index
      %c0_12 = arith.constant 0 : index
      %13 = vector.load %arg7[%c0_11, %c0_12] : memref<16x128xf32, #tpu.memory_space<vmem>>, vector<16x128xf32>
      tpu.vector_store %arg7[%c0_11, %c0_12], %12 {strides = array<i32>} : memref<16x128xf32, #tpu.memory_space<vmem>>, vector<16x128xf32>,
    } else {
    }
    %c0 = arith.constant 0 : index
    %c0_1 = arith.constant 0 : index
    %3 = vector.load %arg7[%c0, %c0_1] : memref<16x128xf32, #tpu.memory_space<vmem>>, vector<16x128xf32>
    %c0_2 = arith.constant 0 : index
    %c0_3 = arith.constant 0 : index
    %4 = vector.load %arg3[%c0_2, %c0_3] : memref<16x128xbf16, #tpu.memory_space<vmem>>, vector<16x128xbf16>
    %c0_4 = arith.constant 0 : index
    %c0_5 = arith.constant 0 : index
    %5 = vector.load %arg4[%c0_4, %c0_5] : memref<128x128xbf16, #tpu.memory_space<vmem>>, vector<128x128xbf16>
    %cst = arith.constant dense<0.000000e+00> : vector<16x128xf32>
    %6 = tpu.matmul %4, %5, %cst {dimension_numbers = #tpu.dot_dimension_numbers<[1], [0], [0], [1], [0, 0, 1, 1], [], []>} : vector<16x128xbf16>, vector<128x128xbf16>, vector<16x128xf32> -> vector<16x128xf32>
    %7 = arith.addf %3, %6 : vector<16x128xf32>
    %c0_6 = arith.constant 0 : index
    %c0_7 = arith.constant 0 : index
    %8 = vector.load %arg7[%c0_6, %c0_7] : memref<16x128xf32, #tpu.memory_space<vmem>>, vector<16x128xf32>
    tpu.vector_store %arg7[%c0_6, %c0_7], %7 {strides = array<i32>} : memref<16x128xf32, #tpu.memory_space<vmem>>, vector<16x128xf32>,
    %c0_i32_8 = arith.constant 0 : i32
    %9 = arith.cmpi eq, %arg2, %c0_i32_8 : i32
    %10 = arith.extui %9 : i1 to i32
    %c0_i32_9 = arith.constant 0 : i32
    %11 = arith.cmpi ne, %10, %c0_i32_9 : i32
    scf.if %11 {
      %c0_10 = arith.constant 0 : index
      %c0_11 = arith.constant 0 : index
      %12 = vector.load %arg7[%c0_10, %c0_11] : memref<16x128xf32, #tpu.memory_space<vmem>>, vector<16x128xf32>
      %c0_12 = arith.constant 0 : index
      %c0_13 = arith.constant 0 : index
      %13 = vector.load %arg5[%c0_12, %c0_13] : memref<1x128xf32, #tpu.memory_space<vmem>>, vector<1x128xf32>
      %14 = vector.broadcast %13 : vector<1x128xf32> to vector<16x128xf32>
      %15 = arith.addf %12, %14 : vector<16x128xf32>
      %16 = arith.truncf %15 : vector<16x128xf32> to vector<16x128xbf16>
      %c0_14 = arith.constant 0 : index
      %c0_15 = arith.constant 0 : index
      %17 = vector.load %arg6[%c0_14, %c0_15] : memref<16x128xbf16, #tpu.memory_space<vmem>>, vector<16x128xbf16>
      tpu.vector_store %arg6[%c0_14, %c0_15], %16 {strides = array<i32>} : memref<16x128xbf16, #tpu.memory_space<vmem>>, vector<16x128xbf16>,
    } else {
    }
    return
  }
  func.func @transform_0(%arg0: i32, %arg1: i32, %arg2: i32) -> (i32, i32) {
    %c0_i32 = arith.constant 0 : i32
    return %arg0, %arg2 : i32, i32
  }
  func.func @transform_1(%arg0: i32, %arg1: i32, %arg2: i32) -> (i32, i32) {
    %c0_i32 = arith.constant 0 : i32
    return %arg2, %arg1 : i32, i32
  }
  func.func @transform_2(%arg0: i32, %arg1: i32, %arg2: i32) -> (i32, i32) {
    %c0_i32 = arith.constant 0 : i32
    %c0_i32_0 = arith.constant 0 : i32
    return %c0_i32, %arg1 : i32, i32
  }
  func.func @transform_3(%arg0: i32, %arg1: i32, %arg2: i32) -> (i32, i32) {
    %c0_i32 = arith.constant 0 : i32
    return %arg0, %arg1 : i32, i32
  }
}

module attributes {stable_mosaic.version = 11 : i64} {
  func.func @_attention_full_kernel(%arg0: i32, %arg1: memref<8x128xbf16, #tpu.memory_space<vmem>>, %arg2: memref<1x1x8xf32, #tpu.memory_space<vmem>>, %arg3: memref<8x128xbf16, #tpu.memory_space<vmem>>) attributes {dimension_semantics = [#tpu.dimension_semantics<parallel>], iteration_bounds = array<i64: 2>, scalar_prefetch = 0 : i64, scratch_operands = 0 : i64, tpu.core_type = #tpu.core_type<tc>, window_params = [{transform_indices = @transform_0, window_bounds = array<i64: 8, 128>}, {transform_indices = @transform_1, window_bounds = array<i64: 1, 1, 8>}, {transform_indices = @transform_2, window_bounds = array<i64: 8, 128>}]} {
    %c0 = arith.constant 0 : index
    %c0_0 = arith.constant 0 : index
    %0 = vector.load %arg1[%c0, %c0_0] : memref<8x128xbf16, #tpu.memory_space<vmem>>, vector<8x128xbf16>
    %c0_1 = arith.constant 0 : index
    %c0_2 = arith.constant 0 : index
    %c0_3 = arith.constant 0 : index
    %1 = vector.load %arg2[%c0_1, %c0_2, %c0_3] : memref<1x1x8xf32, #tpu.memory_space<vmem>>, vector<1x1x8xf32>
    %2 = vector.shape_cast %1 : vector<1x1x8xf32> to vector<1x8xf32>
    %3 = vector.extract_strided_slice %0 {offsets = [0, 0], sizes = [8, 16], strides = [1, 1]} : vector<8x128xbf16> to vector<8x16xbf16>
    %4 = vector.extract_strided_slice %0 {offsets = [0, 32], sizes = [8, 16], strides = [1, 1]} : vector<8x128xbf16> to vector<8x16xbf16>
    %5 = vector.extract_strided_slice %0 {offsets = [0, 64], sizes = [8, 16], strides = [1, 1]} : vector<8x128xbf16> to vector<8x16xbf16>
    %cst = arith.constant dense<0.000000e+00> : vector<8x8xf32>
    %6 = tpu.matmul %3, %4, %cst {dimension_numbers = #tpu.dot_dimension_numbers<[1], [1], [0], [0], [0, 0, 1, 0], [], []>} : vector<8x16xbf16>, vector<8x16xbf16>, vector<8x8xf32> -> vector<8x8xf32>
    %7 = vector.broadcast %2 : vector<1x8xf32> to vector<8x8xf32>
    %8 = arith.addf %6, %7 : vector<8x8xf32>
    %cst_4 = arith.constant dense<0xFF800000> : vector<8xf32>
    %9 = vector.multi_reduction <maximumf>, %8, %cst_4 [1] : vector<8x8xf32> to vector<8xf32>
    %10 = vector.shape_cast %9 : vector<8xf32> to vector<8x1xf32>
    %11 = vector.broadcast %10 : vector<8x1xf32> to vector<8x8xf32>
    %12 = arith.subf %8, %11 : vector<8x8xf32>
    %13 = math.exp %12 : vector<8x8xf32>
    %cst_5 = arith.constant dense<0.000000e+00> : vector<8xf32>
    %14 = vector.multi_reduction <add>, %13, %cst_5 [1] : vector<8x8xf32> to vector<8xf32>
    %15 = vector.shape_cast %14 : vector<8xf32> to vector<8x1xf32>
    %16 = arith.truncf %13 : vector<8x8xf32> to vector<8x8xbf16>
    %cst_6 = arith.constant dense<0.000000e+00> : vector<8x16xf32>
    %17 = tpu.matmul %16, %5, %cst_6 {dimension_numbers = #tpu.dot_dimension_numbers<[1], [0], [0], [1], [0, 0, 1, 1], [], []>} : vector<8x8xbf16>, vector<8x16xbf16>, vector<8x16xf32> -> vector<8x16xf32>
    %18 = tpu.reciprocal %15 {approx = true} : vector<8x1xf32> -> vector<8x1xf32>
    %19 = vector.broadcast %18 : vector<8x1xf32> to vector<8x16xf32>
    %20 = arith.mulf %17, %19 : vector<8x16xf32>
    %21 = vector.extract_strided_slice %0 {offsets = [0, 16], sizes = [8, 16], strides = [1, 1]} : vector<8x128xbf16> to vector<8x16xbf16>
    %22 = vector.extract_strided_slice %0 {offsets = [0, 48], sizes = [8, 16], strides = [1, 1]} : vector<8x128xbf16> to vector<8x16xbf16>
    %23 = vector.extract_strided_slice %0 {offsets = [0, 80], sizes = [8, 16], strides = [1, 1]} : vector<8x128xbf16> to vector<8x16xbf16>
    %cst_7 = arith.constant dense<0.000000e+00> : vector<8x8xf32>
    %24 = tpu.matmul %21, %22, %cst_7 {dimension_numbers = #tpu.dot_dimension_numbers<[1], [1], [0], [0], [0, 0, 1, 0], [], []>} : vector<8x16xbf16>, vector<8x16xbf16>, vector<8x8xf32> -> vector<8x8xf32>
    %25 = vector.broadcast %2 : vector<1x8xf32> to vector<8x8xf32>
    %26 = arith.addf %24, %25 : vector<8x8xf32>
    %cst_8 = arith.constant dense<0xFF800000> : vector<8xf32>
    %27 = vector.multi_reduction <maximumf>, %26, %cst_8 [1] : vector<8x8xf32> to vector<8xf32>
    %28 = vector.shape_cast %27 : vector<8xf32> to vector<8x1xf32>
    %29 = vector.broadcast %28 : vector<8x1xf32> to vector<8x8xf32>
    %30 = arith.subf %26, %29 : vector<8x8xf32>
    %31 = math.exp %30 : vector<8x8xf32>
    %cst_9 = arith.constant dense<0.000000e+00> : vector<8xf32>
    %32 = vector.multi_reduction <add>, %31, %cst_9 [1] : vector<8x8xf32> to vector<8xf32>
    %33 = vector.shape_cast %32 : vector<8xf32> to vector<8x1xf32>
    %34 = arith.truncf %31 : vector<8x8xf32> to vector<8x8xbf16>
    %cst_10 = arith.constant dense<0.000000e+00> : vector<8x16xf32>
    %35 = tpu.matmul %34, %23, %cst_10 {dimension_numbers = #tpu.dot_dimension_numbers<[1], [0], [0], [1], [0, 0, 1, 1], [], []>} : vector<8x8xbf16>, vector<8x16xbf16>, vector<8x16xf32> -> vector<8x16xf32>
    %36 = tpu.reciprocal %33 {approx = true} : vector<8x1xf32> -> vector<8x1xf32>
    %37 = vector.broadcast %36 : vector<8x1xf32> to vector<8x16xf32>
    %38 = arith.mulf %35, %37 : vector<8x16xf32>
    %cst_11 = arith.constant 0.000000e+00 : f32
    %39 = vector.broadcast %cst_11 : f32 to vector<8x96xf32>
    %40 = tpu.concatenate %20, %38, %39 in 1 : vector<8x16xf32>, vector<8x16xf32>, vector<8x96xf32> -> vector<8x128xf32>
    %41 = arith.truncf %40 : vector<8x128xf32> to vector<8x128xbf16>
    %c0_12 = arith.constant 0 : index
    %c0_13 = arith.constant 0 : index
    %42 = vector.load %arg3[%c0_12, %c0_13] : memref<8x128xbf16, #tpu.memory_space<vmem>>, vector<8x128xbf16>
    tpu.vector_store %arg3[%c0_12, %c0_13], %41 {strides = array<i32>} : memref<8x128xbf16, #tpu.memory_space<vmem>>, vector<8x128xbf16>,
    return
  }
  func.func @transform_0(%arg0: i32) -> (i32, i32) {
    %c0_i32 = arith.constant 0 : i32
    %c0_i32_0 = arith.constant 0 : i32
    return %arg0, %c0_i32 : i32, i32
  }
  func.func @transform_1(%arg0: i32) -> (i32, i32, i32) {
    %c0_i32 = arith.constant 0 : i32
    %c0_i32_0 = arith.constant 0 : i32
    %c0_i32_1 = arith.constant 0 : i32
    return %arg0, %c0_i32, %c0_i32_0 : i32, i32, i32
  }
  func.func @transform_2(%arg0: i32) -> (i32, i32) {
    %c0_i32 = arith.constant 0 : i32
    %c0_i32_0 = arith.constant 0 : i32
    return %arg0, %c0_i32 : i32, i32
  }
}

module attributes {stable_mosaic.version = 11 : i64} {
  func.func @_linear_kernel(%arg0: i32, %arg1: i32, %arg2: i32, %arg3: memref<8x128xbf16, #tpu.memory_space<vmem>>, %arg4: memref<128x128xbf16, #tpu.memory_space<vmem>>, %arg5: memref<1x128xf32, #tpu.memory_space<vmem>>, %arg6: memref<8x128xbf16, #tpu.memory_space<vmem>>, %arg7: memref<1x128xf32, #tpu.memory_space<vmem>>, %arg8: memref<1x128xf32, #tpu.memory_space<vmem>>, %arg9: memref<8x128xbf16, #tpu.memory_space<vmem>>, %arg10: memref<8x128xf32, #tpu.memory_space<vmem>>) attributes {dimension_semantics = [#tpu.dimension_semantics<parallel>, #tpu.dimension_semantics<parallel>, #tpu.dimension_semantics<arbitrary>], iteration_bounds = array<i64: 2, 1, 1>, scalar_prefetch = 0 : i64, scratch_operands = 1 : i64, tpu.core_type = #tpu.core_type<tc>, window_params = [{transform_indices = @transform_0, window_bounds = array<i64: 8, 128>}, {transform_indices = @transform_1, window_bounds = array<i64: 128, 128>}, {transform_indices = @transform_2, window_bounds = array<i64: 1, 128>}, {transform_indices = @transform_3, window_bounds = array<i64: 8, 128>}, {transform_indices = @transform_4, window_bounds = array<i64: 1, 128>}, {transform_indices = @transform_5, window_bounds = array<i64: 1, 128>}, {transform_indices = @transform_6, window_bounds = array<i64: 8, 128>}]} {
    %c0_i32 = arith.constant 0 : i32
    %0 = arith.cmpi eq, %arg2, %c0_i32 : i32
    %1 = arith.extui %0 : i1 to i32
    %c0_i32_0 = arith.constant 0 : i32
    %2 = arith.cmpi ne, %1, %c0_i32_0 : i32
    scf.if %2 {
      %cst_10 = arith.constant 0.000000e+00 : f32
      %12 = vector.broadcast %cst_10 : f32 to vector<8x128xf32>
      %c0_11 = arith.constant 0 : index
      %c0_12 = arith.constant 0 : index
      %13 = vector.load %arg10[%c0_11, %c0_12] : memref<8x128xf32, #tpu.memory_space<vmem>>, vector<8x128xf32>
      tpu.vector_store %arg10[%c0_11, %c0_12], %12 {strides = array<i32>} : memref<8x128xf32, #tpu.memory_space<vmem>>, vector<8x128xf32>,
    } else {
    }
    %c0 = arith.constant 0 : index
    %c0_1 = arith.constant 0 : index
    %3 = vector.load %arg10[%c0, %c0_1] : memref<8x128xf32, #tpu.memory_space<vmem>>, vector<8x128xf32>
    %c0_2 = arith.constant 0 : index
    %c0_3 = arith.constant 0 : index
    %4 = vector.load %arg3[%c0_2, %c0_3] : memref<8x128xbf16, #tpu.memory_space<vmem>>, vector<8x128xbf16>
    %c0_4 = arith.constant 0 : index
    %c0_5 = arith.constant 0 : index
    %5 = vector.load %arg4[%c0_4, %c0_5] : memref<128x128xbf16, #tpu.memory_space<vmem>>, vector<128x128xbf16>
    %cst = arith.constant dense<0.000000e+00> : vector<8x128xf32>
    %6 = tpu.matmul %4, %5, %cst {dimension_numbers = #tpu.dot_dimension_numbers<[1], [0], [0], [1], [0, 0, 1, 1], [], []>} : vector<8x128xbf16>, vector<128x128xbf16>, vector<8x128xf32> -> vector<8x128xf32>
    %7 = arith.addf %3, %6 : vector<8x128xf32>
    %c0_6 = arith.constant 0 : index
    %c0_7 = arith.constant 0 : index
    %8 = vector.load %arg10[%c0_6, %c0_7] : memref<8x128xf32, #tpu.memory_space<vmem>>, vector<8x128xf32>
    tpu.vector_store %arg10[%c0_6, %c0_7], %7 {strides = array<i32>} : memref<8x128xf32, #tpu.memory_space<vmem>>, vector<8x128xf32>,
    %c0_i32_8 = arith.constant 0 : i32
    %9 = arith.cmpi eq, %arg2, %c0_i32_8 : i32
    %10 = arith.extui %9 : i1 to i32
    %c0_i32_9 = arith.constant 0 : i32
    %11 = arith.cmpi ne, %10, %c0_i32_9 : i32
    scf.if %11 {
      %c0_10 = arith.constant 0 : index
      %c0_11 = arith.constant 0 : index
      %12 = vector.load %arg10[%c0_10, %c0_11] : memref<8x128xf32, #tpu.memory_space<vmem>>, vector<8x128xf32>
      %c0_12 = arith.constant 0 : index
      %c0_13 = arith.constant 0 : index
      %13 = vector.load %arg5[%c0_12, %c0_13] : memref<1x128xf32, #tpu.memory_space<vmem>>, vector<1x128xf32>
      %14 = vector.broadcast %13 : vector<1x128xf32> to vector<8x128xf32>
      %15 = arith.addf %12, %14 : vector<8x128xf32>
      %c0_14 = arith.constant 0 : index
      %c0_15 = arith.constant 0 : index
      %16 = vector.load %arg6[%c0_14, %c0_15] : memref<8x128xbf16, #tpu.memory_space<vmem>>, vector<8x128xbf16>
      %17 = arith.extf %16 : vector<8x128xbf16> to vector<8x128xf32>
      %18 = arith.addf %15, %17 : vector<8x128xf32>
      %19 = tpu.iota {dimensions = array<i32: 1>} : vector<8x128xi32>
      %c32_i32 = arith.constant 32 : i32
      %20 = vector.broadcast %c32_i32 : i32 to vector<8x128xi32>
      %21 = arith.cmpi slt, %19, %20 : vector<8x128xi32>
      %cst_16 = arith.constant 0.000000e+00 : f32
      %22 = vector.broadcast %cst_16 : f32 to vector<8x128xf32>
      %23 = arith.select %21, %18, %22 : vector<8x128xi1>, vector<8x128xf32>
      %cst_17 = arith.constant dense<0.000000e+00> : vector<8xf32>
      %24 = vector.multi_reduction <add>, %23, %cst_17 [1] : vector<8x128xf32> to vector<8xf32>
      %25 = vector.shape_cast %24 : vector<8xf32> to vector<8x1xf32>
      %cst_18 = arith.constant 3.200000e+01 : f32
      %26 = vector.broadcast %cst_18 : f32 to vector<8x1xf32>
      %27 = arith.divf %25, %26 : vector<8x1xf32>
      %28 = vector.broadcast %27 : vector<8x1xf32> to vector<8x128xf32>
      %29 = arith.subf %18, %28 : vector<8x128xf32>
      %cst_19 = arith.constant 0.000000e+00 : f32
      %30 = vector.broadcast %cst_19 : f32 to vector<8x128xf32>
      %31 = arith.select %21, %29, %30 : vector<8x128xi1>, vector<8x128xf32>
      %32 = arith.mulf %31, %31 : vector<8x128xf32>
      %cst_20 = arith.constant dense<0.000000e+00> : vector<8xf32>
      %33 = vector.multi_reduction <add>, %32, %cst_20 [1] : vector<8x128xf32> to vector<8xf32>
      %34 = vector.shape_cast %33 : vector<8xf32> to vector<8x1xf32>
      %cst_21 = arith.constant 3.200000e+01 : f32
      %35 = vector.broadcast %cst_21 : f32 to vector<8x1xf32>
      %36 = arith.divf %34, %35 : vector<8x1xf32>
      %37 = vector.broadcast %27 : vector<8x1xf32> to vector<8x128xf32>
      %38 = arith.subf %18, %37 : vector<8x128xf32>
      %cst_22 = arith.constant 9.99999996E-13 : f32
      %39 = vector.broadcast %cst_22 : f32 to vector<8x1xf32>
      %40 = arith.addf %36, %39 : vector<8x1xf32>
      %41 = math.rsqrt %40 : vector<8x1xf32>
      %42 = vector.broadcast %41 : vector<8x1xf32> to vector<8x128xf32>
      %43 = arith.mulf %38, %42 : vector<8x128xf32>
      %c0_23 = arith.constant 0 : index
      %c0_24 = arith.constant 0 : index
      %44 = vector.load %arg7[%c0_23, %c0_24] : memref<1x128xf32, #tpu.memory_space<vmem>>, vector<1x128xf32>
      %45 = vector.broadcast %44 : vector<1x128xf32> to vector<8x128xf32>
      %46 = arith.mulf %43, %45 : vector<8x128xf32>
      %c0_25 = arith.constant 0 : index
      %c0_26 = arith.constant 0 : index
      %47 = vector.load %arg8[%c0_25, %c0_26] : memref<1x128xf32, #tpu.memory_space<vmem>>, vector<1x128xf32>
      %48 = vector.broadcast %47 : vector<1x128xf32> to vector<8x128xf32>
      %49 = arith.addf %46, %48 : vector<8x128xf32>
      %50 = arith.truncf %49 : vector<8x128xf32> to vector<8x128xbf16>
      %c0_27 = arith.constant 0 : index
      %c0_28 = arith.constant 0 : index
      %51 = vector.load %arg9[%c0_27, %c0_28] : memref<8x128xbf16, #tpu.memory_space<vmem>>, vector<8x128xbf16>
      tpu.vector_store %arg9[%c0_27, %c0_28], %50 {strides = array<i32>} : memref<8x128xbf16, #tpu.memory_space<vmem>>, vector<8x128xbf16>,
    } else {
    }
    return
  }
  func.func @transform_0(%arg0: i32, %arg1: i32, %arg2: i32) -> (i32, i32) {
    %c0_i32 = arith.constant 0 : i32
    return %arg0, %arg2 : i32, i32
  }
  func.func @transform_1(%arg0: i32, %arg1: i32, %arg2: i32) -> (i32, i32) {
    %c0_i32 = arith.constant 0 : i32
    return %arg2, %arg1 : i32, i32
  }
  func.func @transform_2(%arg0: i32, %arg1: i32, %arg2: i32) -> (i32, i32) {
    %c0_i32 = arith.constant 0 : i32
    %c0_i32_0 = arith.constant 0 : i32
    return %c0_i32, %arg1 : i32, i32
  }
  func.func @transform_3(%arg0: i32, %arg1: i32, %arg2: i32) -> (i32, i32) {
    %c0_i32 = arith.constant 0 : i32
    return %arg0, %arg1 : i32, i32
  }
  func.func @transform_4(%arg0: i32, %arg1: i32, %arg2: i32) -> (i32, i32) {
    %c0_i32 = arith.constant 0 : i32
    %c0_i32_0 = arith.constant 0 : i32
    return %c0_i32, %arg1 : i32, i32
  }
  func.func @transform_5(%arg0: i32, %arg1: i32, %arg2: i32) -> (i32, i32) {
    %c0_i32 = arith.constant 0 : i32
    %c0_i32_0 = arith.constant 0 : i32
    return %c0_i32, %arg1 : i32, i32
  }
  func.func @transform_6(%arg0: i32, %arg1: i32, %arg2: i32) -> (i32, i32) {
    %c0_i32 = arith.constant 0 : i32
    return %arg0, %arg1 : i32, i32
  }
}

module attributes {stable_mosaic.version = 11 : i64} {
  func.func @_linear_kernel(%arg0: i32, %arg1: i32, %arg2: i32, %arg3: memref<16x128xbf16, #tpu.memory_space<vmem>>, %arg4: memref<128x128xbf16, #tpu.memory_space<vmem>>, %arg5: memref<1x128xf32, #tpu.memory_space<vmem>>, %arg6: memref<16x128xbf16, #tpu.memory_space<vmem>>, %arg7: memref<16x128xf32, #tpu.memory_space<vmem>>) attributes {dimension_semantics = [#tpu.dimension_semantics<parallel>, #tpu.dimension_semantics<parallel>, #tpu.dimension_semantics<arbitrary>], iteration_bounds = array<i64: 1, 1, 1>, scalar_prefetch = 0 : i64, scratch_operands = 1 : i64, tpu.core_type = #tpu.core_type<tc>, window_params = [{transform_indices = @transform_0, window_bounds = array<i64: 16, 128>}, {transform_indices = @transform_1, window_bounds = array<i64: 128, 128>}, {transform_indices = @transform_2, window_bounds = array<i64: 1, 128>}, {transform_indices = @transform_3, window_bounds = array<i64: 16, 128>}]} {
    %c0_i32 = arith.constant 0 : i32
    %0 = arith.cmpi eq, %arg2, %c0_i32 : i32
    %1 = arith.extui %0 : i1 to i32
    %c0_i32_0 = arith.constant 0 : i32
    %2 = arith.cmpi ne, %1, %c0_i32_0 : i32
    scf.if %2 {
      %cst_10 = arith.constant 0.000000e+00 : f32
      %12 = vector.broadcast %cst_10 : f32 to vector<16x128xf32>
      %c0_11 = arith.constant 0 : index
      %c0_12 = arith.constant 0 : index
      %13 = vector.load %arg7[%c0_11, %c0_12] : memref<16x128xf32, #tpu.memory_space<vmem>>, vector<16x128xf32>
      tpu.vector_store %arg7[%c0_11, %c0_12], %12 {strides = array<i32>} : memref<16x128xf32, #tpu.memory_space<vmem>>, vector<16x128xf32>,
    } else {
    }
    %c0 = arith.constant 0 : index
    %c0_1 = arith.constant 0 : index
    %3 = vector.load %arg7[%c0, %c0_1] : memref<16x128xf32, #tpu.memory_space<vmem>>, vector<16x128xf32>
    %c0_2 = arith.constant 0 : index
    %c0_3 = arith.constant 0 : index
    %4 = vector.load %arg3[%c0_2, %c0_3] : memref<16x128xbf16, #tpu.memory_space<vmem>>, vector<16x128xbf16>
    %c0_4 = arith.constant 0 : index
    %c0_5 = arith.constant 0 : index
    %5 = vector.load %arg4[%c0_4, %c0_5] : memref<128x128xbf16, #tpu.memory_space<vmem>>, vector<128x128xbf16>
    %cst = arith.constant dense<0.000000e+00> : vector<16x128xf32>
    %6 = tpu.matmul %4, %5, %cst {dimension_numbers = #tpu.dot_dimension_numbers<[1], [0], [0], [1], [0, 0, 1, 1], [], []>} : vector<16x128xbf16>, vector<128x128xbf16>, vector<16x128xf32> -> vector<16x128xf32>
    %7 = arith.addf %3, %6 : vector<16x128xf32>
    %c0_6 = arith.constant 0 : index
    %c0_7 = arith.constant 0 : index
    %8 = vector.load %arg7[%c0_6, %c0_7] : memref<16x128xf32, #tpu.memory_space<vmem>>, vector<16x128xf32>
    tpu.vector_store %arg7[%c0_6, %c0_7], %7 {strides = array<i32>} : memref<16x128xf32, #tpu.memory_space<vmem>>, vector<16x128xf32>,
    %c0_i32_8 = arith.constant 0 : i32
    %9 = arith.cmpi eq, %arg2, %c0_i32_8 : i32
    %10 = arith.extui %9 : i1 to i32
    %c0_i32_9 = arith.constant 0 : i32
    %11 = arith.cmpi ne, %10, %c0_i32_9 : i32
    scf.if %11 {
      %c0_10 = arith.constant 0 : index
      %c0_11 = arith.constant 0 : index
      %12 = vector.load %arg7[%c0_10, %c0_11] : memref<16x128xf32, #tpu.memory_space<vmem>>, vector<16x128xf32>
      %c0_12 = arith.constant 0 : index
      %c0_13 = arith.constant 0 : index
      %13 = vector.load %arg5[%c0_12, %c0_13] : memref<1x128xf32, #tpu.memory_space<vmem>>, vector<1x128xf32>
      %14 = vector.broadcast %13 : vector<1x128xf32> to vector<16x128xf32>
      %15 = arith.addf %12, %14 : vector<16x128xf32>
      %cst_14 = arith.constant 5.000000e-01 : f32
      %16 = vector.broadcast %cst_14 : f32 to vector<16x128xf32>
      %17 = arith.mulf %16, %15 : vector<16x128xf32>
      %cst_15 = arith.constant 4.471500e-02 : f32
      %18 = vector.broadcast %cst_15 : f32 to vector<16x128xf32>
      %19 = arith.mulf %18, %15 : vector<16x128xf32>
      %20 = arith.mulf %19, %15 : vector<16x128xf32>
      %21 = arith.mulf %20, %15 : vector<16x128xf32>
      %22 = arith.addf %15, %21 : vector<16x128xf32>
      %cst_16 = arith.constant 0.797884583 : f32
      %23 = vector.broadcast %cst_16 : f32 to vector<16x128xf32>
      %24 = arith.mulf %23, %22 : vector<16x128xf32>
      %25 = math.tanh %24 : vector<16x128xf32>
      %cst_17 = arith.constant 1.000000e+00 : f32
      %26 = vector.broadcast %cst_17 : f32 to vector<16x128xf32>
      %27 = arith.addf %26, %25 : vector<16x128xf32>
      %28 = arith.mulf %17, %27 : vector<16x128xf32>
      %29 = arith.truncf %28 : vector<16x128xf32> to vector<16x128xbf16>
      %c0_18 = arith.constant 0 : index
      %c0_19 = arith.constant 0 : index
      %30 = vector.load %arg6[%c0_18, %c0_19] : memref<16x128xbf16, #tpu.memory_space<vmem>>, vector<16x128xbf16>
      tpu.vector_store %arg6[%c0_18, %c0_19], %29 {strides = array<i32>} : memref<16x128xbf16, #tpu.memory_space<vmem>>, vector<16x128xbf16>,
    } else {
    }
    return
  }
  func.func @transform_0(%arg0: i32, %arg1: i32, %arg2: i32) -> (i32, i32) {
    %c0_i32 = arith.constant 0 : i32
    return %arg0, %arg2 : i32, i32
  }
  func.func @transform_1(%arg0: i32, %arg1: i32, %arg2: i32) -> (i32, i32) {
    %c0_i32 = arith.constant 0 : i32
    return %arg2, %arg1 : i32, i32
  }
  func.func @transform_2(%arg0: i32, %arg1: i32, %arg2: i32) -> (i32, i32) {
    %c0_i32 = arith.constant 0 : i32
    %c0_i32_0 = arith.constant 0 : i32
    return %c0_i32, %arg1 : i32, i32
  }
  func.func @transform_3(%arg0: i32, %arg1: i32, %arg2: i32) -> (i32, i32) {
    %c0_i32 = arith.constant 0 : i32
    return %arg0, %arg1 : i32, i32
  }
}

module attributes {stable_mosaic.version = 11 : i64} {
  func.func @_linear_kernel(%arg0: i32, %arg1: i32, %arg2: i32, %arg3: memref<8x128xbf16, #tpu.memory_space<vmem>>, %arg4: memref<128x128xbf16, #tpu.memory_space<vmem>>, %arg5: memref<1x128xf32, #tpu.memory_space<vmem>>, %arg6: memref<8x128xbf16, #tpu.memory_space<vmem>>, %arg7: memref<8x128xf32, #tpu.memory_space<vmem>>) attributes {dimension_semantics = [#tpu.dimension_semantics<parallel>, #tpu.dimension_semantics<parallel>, #tpu.dimension_semantics<arbitrary>], iteration_bounds = array<i64: 1, 1, 1>, scalar_prefetch = 0 : i64, scratch_operands = 1 : i64, tpu.core_type = #tpu.core_type<tc>, window_params = [{transform_indices = @transform_0, window_bounds = array<i64: 8, 128>}, {transform_indices = @transform_1, window_bounds = array<i64: 128, 128>}, {transform_indices = @transform_2, window_bounds = array<i64: 1, 128>}, {transform_indices = @transform_3, window_bounds = array<i64: 8, 128>}]} {
    %c0_i32 = arith.constant 0 : i32
    %0 = arith.cmpi eq, %arg2, %c0_i32 : i32
    %1 = arith.extui %0 : i1 to i32
    %c0_i32_0 = arith.constant 0 : i32
    %2 = arith.cmpi ne, %1, %c0_i32_0 : i32
    scf.if %2 {
      %cst_10 = arith.constant 0.000000e+00 : f32
      %12 = vector.broadcast %cst_10 : f32 to vector<8x128xf32>
      %c0_11 = arith.constant 0 : index
      %c0_12 = arith.constant 0 : index
      %13 = vector.load %arg7[%c0_11, %c0_12] : memref<8x128xf32, #tpu.memory_space<vmem>>, vector<8x128xf32>
      tpu.vector_store %arg7[%c0_11, %c0_12], %12 {strides = array<i32>} : memref<8x128xf32, #tpu.memory_space<vmem>>, vector<8x128xf32>,
    } else {
    }
    %c0 = arith.constant 0 : index
    %c0_1 = arith.constant 0 : index
    %3 = vector.load %arg7[%c0, %c0_1] : memref<8x128xf32, #tpu.memory_space<vmem>>, vector<8x128xf32>
    %c0_2 = arith.constant 0 : index
    %c0_3 = arith.constant 0 : index
    %4 = vector.load %arg3[%c0_2, %c0_3] : memref<8x128xbf16, #tpu.memory_space<vmem>>, vector<8x128xbf16>
    %c0_4 = arith.constant 0 : index
    %c0_5 = arith.constant 0 : index
    %5 = vector.load %arg4[%c0_4, %c0_5] : memref<128x128xbf16, #tpu.memory_space<vmem>>, vector<128x128xbf16>
    %cst = arith.constant dense<0.000000e+00> : vector<8x128xf32>
    %6 = tpu.matmul %4, %5, %cst {dimension_numbers = #tpu.dot_dimension_numbers<[1], [0], [0], [1], [0, 0, 1, 1], [], []>} : vector<8x128xbf16>, vector<128x128xbf16>, vector<8x128xf32> -> vector<8x128xf32>
    %7 = arith.addf %3, %6 : vector<8x128xf32>
    %c0_6 = arith.constant 0 : index
    %c0_7 = arith.constant 0 : index
    %8 = vector.load %arg7[%c0_6, %c0_7] : memref<8x128xf32, #tpu.memory_space<vmem>>, vector<8x128xf32>
    tpu.vector_store %arg7[%c0_6, %c0_7], %7 {strides = array<i32>} : memref<8x128xf32, #tpu.memory_space<vmem>>, vector<8x128xf32>,
    %c0_i32_8 = arith.constant 0 : i32
    %9 = arith.cmpi eq, %arg2, %c0_i32_8 : i32
    %10 = arith.extui %9 : i1 to i32
    %c0_i32_9 = arith.constant 0 : i32
    %11 = arith.cmpi ne, %10, %c0_i32_9 : i32
    scf.if %11 {
      %c0_10 = arith.constant 0 : index
      %c0_11 = arith.constant 0 : index
      %12 = vector.load %arg7[%c0_10, %c0_11] : memref<8x128xf32, #tpu.memory_space<vmem>>, vector<8x128xf32>
      %c0_12 = arith.constant 0 : index
      %c0_13 = arith.constant 0 : index
      %13 = vector.load %arg5[%c0_12, %c0_13] : memref<1x128xf32, #tpu.memory_space<vmem>>, vector<1x128xf32>
      %14 = vector.broadcast %13 : vector<1x128xf32> to vector<8x128xf32>
      %15 = arith.addf %12, %14 : vector<8x128xf32>
      %16 = math.tanh %15 : vector<8x128xf32>
      %17 = arith.truncf %16 : vector<8x128xf32> to vector<8x128xbf16>
      %c0_14 = arith.constant 0 : index
      %c0_15 = arith.constant 0 : index
      %18 = vector.load %arg6[%c0_14, %c0_15] : memref<8x128xbf16, #tpu.memory_space<vmem>>, vector<8x128xbf16>
      tpu.vector_store %arg6[%c0_14, %c0_15], %17 {strides = array<i32>} : memref<8x128xbf16, #tpu.memory_space<vmem>>, vector<8x128xbf16>,
    } else {
    }
    return
  }
  func.func @transform_0(%arg0: i32, %arg1: i32, %arg2: i32) -> (i32, i32) {
    %c0_i32 = arith.constant 0 : i32
    return %arg0, %arg2 : i32, i32
  }
  func.func @transform_1(%arg0: i32, %arg1: i32, %arg2: i32) -> (i32, i32) {
    %c0_i32 = arith.constant 0 : i32
    return %arg2, %arg1 : i32, i32
  }
  func.func @transform_2(%arg0: i32, %arg1: i32, %arg2: i32) -> (i32, i32) {
    %c0_i32 = arith.constant 0 : i32
    %c0_i32_0 = arith.constant 0 : i32
    return %c0_i32, %arg1 : i32, i32
  }
  func.func @transform_3(%arg0: i32, %arg1: i32, %arg2: i32) -> (i32, i32) {
    %c0_i32 = arith.constant 0 : i32
    return %arg0, %arg1 : i32, i32
  }
}

module attributes {stable_mosaic.version = 11 : i64} {
  func.func @_linear_kernel(%arg0: i32, %arg1: i32, %arg2: i32, %arg3: memref<8x128xbf16, #tpu.memory_space<vmem>>, %arg4: memref<128x128xbf16, #tpu.memory_space<vmem>>, %arg5: memref<1x128xf32, #tpu.memory_space<vmem>>, %arg6: memref<8x128xf32, #tpu.memory_space<vmem>>, %arg7: memref<8x128xf32, #tpu.memory_space<vmem>>) attributes {dimension_semantics = [#tpu.dimension_semantics<parallel>, #tpu.dimension_semantics<parallel>, #tpu.dimension_semantics<arbitrary>], iteration_bounds = array<i64: 1, 1, 1>, scalar_prefetch = 0 : i64, scratch_operands = 1 : i64, tpu.core_type = #tpu.core_type<tc>, window_params = [{transform_indices = @transform_0, window_bounds = array<i64: 8, 128>}, {transform_indices = @transform_1, window_bounds = array<i64: 128, 128>}, {transform_indices = @transform_2, window_bounds = array<i64: 1, 128>}, {transform_indices = @transform_3, window_bounds = array<i64: 8, 128>}]} {
    %c0_i32 = arith.constant 0 : i32
    %0 = arith.cmpi eq, %arg2, %c0_i32 : i32
    %1 = arith.extui %0 : i1 to i32
    %c0_i32_0 = arith.constant 0 : i32
    %2 = arith.cmpi ne, %1, %c0_i32_0 : i32
    scf.if %2 {
      %cst_10 = arith.constant 0.000000e+00 : f32
      %12 = vector.broadcast %cst_10 : f32 to vector<8x128xf32>
      %c0_11 = arith.constant 0 : index
      %c0_12 = arith.constant 0 : index
      %13 = vector.load %arg7[%c0_11, %c0_12] : memref<8x128xf32, #tpu.memory_space<vmem>>, vector<8x128xf32>
      tpu.vector_store %arg7[%c0_11, %c0_12], %12 {strides = array<i32>} : memref<8x128xf32, #tpu.memory_space<vmem>>, vector<8x128xf32>,
    } else {
    }
    %c0 = arith.constant 0 : index
    %c0_1 = arith.constant 0 : index
    %3 = vector.load %arg7[%c0, %c0_1] : memref<8x128xf32, #tpu.memory_space<vmem>>, vector<8x128xf32>
    %c0_2 = arith.constant 0 : index
    %c0_3 = arith.constant 0 : index
    %4 = vector.load %arg3[%c0_2, %c0_3] : memref<8x128xbf16, #tpu.memory_space<vmem>>, vector<8x128xbf16>
    %c0_4 = arith.constant 0 : index
    %c0_5 = arith.constant 0 : index
    %5 = vector.load %arg4[%c0_4, %c0_5] : memref<128x128xbf16, #tpu.memory_space<vmem>>, vector<128x128xbf16>
    %cst = arith.constant dense<0.000000e+00> : vector<8x128xf32>
    %6 = tpu.matmul %4, %5, %cst {dimension_numbers = #tpu.dot_dimension_numbers<[1], [0], [0], [1], [0, 0, 1, 1], [], []>} : vector<8x128xbf16>, vector<128x128xbf16>, vector<8x128xf32> -> vector<8x128xf32>
    %7 = arith.addf %3, %6 : vector<8x128xf32>
    %c0_6 = arith.constant 0 : index
    %c0_7 = arith.constant 0 : index
    %8 = vector.load %arg7[%c0_6, %c0_7] : memref<8x128xf32, #tpu.memory_space<vmem>>, vector<8x128xf32>
    tpu.vector_store %arg7[%c0_6, %c0_7], %7 {strides = array<i32>} : memref<8x128xf32, #tpu.memory_space<vmem>>, vector<8x128xf32>,
    %c0_i32_8 = arith.constant 0 : i32
    %9 = arith.cmpi eq, %arg2, %c0_i32_8 : i32
    %10 = arith.extui %9 : i1 to i32
    %c0_i32_9 = arith.constant 0 : i32
    %11 = arith.cmpi ne, %10, %c0_i32_9 : i32
    scf.if %11 {
      %c0_10 = arith.constant 0 : index
      %c0_11 = arith.constant 0 : index
      %12 = vector.load %arg7[%c0_10, %c0_11] : memref<8x128xf32, #tpu.memory_space<vmem>>, vector<8x128xf32>
      %c0_12 = arith.constant 0 : index
      %c0_13 = arith.constant 0 : index
      %13 = vector.load %arg5[%c0_12, %c0_13] : memref<1x128xf32, #tpu.memory_space<vmem>>, vector<1x128xf32>
      %14 = vector.broadcast %13 : vector<1x128xf32> to vector<8x128xf32>
      %15 = arith.addf %12, %14 : vector<8x128xf32>
      %c0_14 = arith.constant 0 : index
      %c0_15 = arith.constant 0 : index
      %16 = vector.load %arg6[%c0_14, %c0_15] : memref<8x128xf32, #tpu.memory_space<vmem>>, vector<8x128xf32>
      tpu.vector_store %arg6[%c0_14, %c0_15], %15 {strides = array<i32>} : memref<8x128xf32, #tpu.memory_space<vmem>>, vector<8x128xf32>,
    } else {
    }
    return
  }
  func.func @transform_0(%arg0: i32, %arg1: i32, %arg2: i32) -> (i32, i32) {
    %c0_i32 = arith.constant 0 : i32
    return %arg0, %arg2 : i32, i32
  }
  func.func @transform_1(%arg0: i32, %arg1: i32, %arg2: i32) -> (i32, i32) {
    %c0_i32 = arith.constant 0 : i32
    return %arg2, %arg1 : i32, i32
  }
  func.func @transform_2(%arg0: i32, %arg1: i32, %arg2: i32) -> (i32, i32) {
    %c0_i32 = arith.constant 0 : i32
    %c0_i32_0 = arith.constant 0 : i32
    return %c0_i32, %arg1 : i32, i32
  }
  func.func @transform_3(%arg0: i32, %arg1: i32, %arg2: i32) -> (i32, i32) {
    %c0_i32 = arith.constant 0 : i32
    return %arg0, %arg1 : i32, i32
  }
}

</mosaic_0001>

<llo_original>
// kernel: classifier_forward.13
$region0: #{classifier_forward.13}
  #allocation0 [shape = 'u32[]', space=smem, size = 0x4, offset = 0x4, fixed_abs, tag = 'smem constant byte address 0x4 - core index']
  #allocation1 [shape = 'u32[144,128]{1,0:T(1,128)}', space=vmem, size = 0x12000, scoped, tag = 'internal scratch']
  %s0 = inlined_call_operand.vmem [shape: f32[16,32], index: 0, kind: input, shape index: {}]
  %s1 = inlined_call_operand.vmem [shape: f32[1,32], index: 1, kind: input, shape index: {}]
  %s2 = inlined_call_operand.vmem [shape: f32[1,32], index: 2, kind: input, shape index: {}]
  %s3 = inlined_call_operand.vmem [shape: bf16[16,32], index: 3, kind: output, shape index: {}]
  %s4 = sld [smem:[#allocation0]]
  $region22: #{classifier_forward.13} parent=0
    _
  %s6 = ssub.s32 1, %s4
  %s7 = scalar_select 0, %s6, %s4
  // Predicated region
  $region2: #{classifier_forward.13} parent=0 // pred_check
    _
  $region3: #{classifier_forward.13} parent=0 // pred_check_branch
    %9 = sbr.rel (0) target = $region5
  $region4: #{classifier_forward.13} parent=0 // pred_region
    _
  $region5: #{classifier_forward.13} parent=0 // pred_fallthru
    _
  // Predicated region
  $region6: #{classifier_forward.13} parent=0 // pred_check
    _
  $region7: #{classifier_forward.13} parent=0 // pred_check_branch
    %11 = sbr.rel (0) target = $region9
  $region8: #{classifier_forward.13} parent=0 // pred_region
    _
  $region9: #{classifier_forward.13} parent=0 // pred_fallthru
    _
  // Predicated region
  $region10: #{classifier_forward.13} parent=0 // pred_check
    _
  $region11: #{classifier_forward.13} parent=0 // pred_check_branch
    %13 = sbr.rel (0) target = $region13
  $region12: #{classifier_forward.13} parent=0 // pred_region
    _
  $region13: #{classifier_forward.13} parent=0 // pred_fallthru
    _
  %v14 = vld [vmem:[%s0] sm:$0xff]
  %v15 = vld [vmem:[%s0 + $0x8] sm:$0xff]
  %vm16 = vcmask 261120
  %v17 = vsel %vm16, %v14, 0.0
  %18 = vadd.xlane.f32.xlu0 %v17
  %v19 = vpop.xlane.xlu0 %18
  %v20 = vsel %vm16, %v15, 0.0
  %21 = vadd.xlane.f32.xlu0 %v20
  %v22 = vpop.xlane.xlu0 %21
  %v23 = vrcp.pop 32.0
  %v24 = vmul.f32 %v19, %v23
  %v25 = vmul.f32 %v22, %v23
  %v26 = vsub.f32 %v14, %v24
  %v27 = vsub.f32 %v15, %v25
  %v28 = vmul.f32 %v26, %v26
  %v29 = vmul.f32 %v27, %v27
  %v30 = vsel %vm16, %v28, 0.0
  %31 = vadd.xlane.f32.xlu0 %v30
  %v32 = vpop.xlane.xlu0 %31
  %v33 = vsel %vm16, %v29, 0.0
  %34 = vadd.xlane.f32.xlu0 %v33
  %v35 = vpop.xlane.xlu0 %34
  %v36 = vmul.f32 %v32, %v23
  %v37 = vmul.f32 %v35, %v23
  %v38 = vadd.f32 %v36, 1e-12
  %v39 = vadd.f32 %v37, 1e-12
  %v40 = vrsqrt.pop %v38
  %v41 = vrsqrt.pop %v39
  %v42 = vmul.f32 %v26, %v40
  %v43 = vmul.f32 %v27, %v41
  %v44 = vld [vmem:[%s1] sm:$0x1]
  %v46 = vlaneseq
  %v47 = vshrl.u32 %v46, 7
  %v48 = vsub.s32 0, %v47
  %v49 = vrot.slane %v44, %v48
  %v51 = vmul.f32 %v42, %v49
  %v52 = vmul.f32 %v43, %v49
  %v53 = vld [vmem:[%s2] sm:$0x1]
  %v55 = vlaneseq
  %v56 = vshrl.u32 %v55, 7
  %v57 = vsub.s32 0, %v56
  %v58 = vrot.slane %v53, %v57
  %v60 = vadd.f32 %v51, %v58
  %v61 = vadd.f32 %v52, %v58
  %v62 = vpack.c.bf16 %v61, %v60
  %v64 = vunpack.c.l.b16 %v62
  %v65 = vunpack.c.h.b16 %v62
  %v66 = vpack.c.b16 %v64, %v64
  %v67 = vpack.c.b16 %v65, %v65
  %vm70 = vcmask 257024
  %71 = vst.msk [vmem:[%s3] sm:$0xf] %vm70, %v66
  %72 = vst.msk [vmem:[%s3 + $0x4] sm:$0xf] %vm70, %v67
  // Predicated region
  $region14: #{classifier_forward.13} parent=0 // pred_check
    _
  $region15: #{classifier_forward.13} parent=0 // pred_check_branch
    %74 = sbr.rel (0) target = $region17
  $region16: #{classifier_forward.13} parent=0 // pred_region
    _
  $region17: #{classifier_forward.13} parent=0 // pred_fallthru
    _
  // Predicated region
  $region18: #{classifier_forward.13} parent=0 // pred_check
    _
  $region19: #{classifier_forward.13} parent=0 // pred_check_branch
    %76 = sbr.rel (0) target = $region21
  $region20: #{classifier_forward.13} parent=0 // pred_region
    _
  $region21: #{classifier_forward.13} parent=0 // pred_fallthru
    _

// kernel: classifier_forward.14
$region0: #{classifier_forward.14}
  #allocation0 [shape = 'u32[]', space=smem, size = 0x4, offset = 0x4, fixed_abs, tag = 'smem constant byte address 0x4 - core index']
  #allocation1 [shape = 'u32[144,128]{1,0:T(1,128)}', space=vmem, size = 0x12000, scoped, tag = 'internal scratch']
  #allocation2 [shape = 'f32[16,128]{1,0:T(8,128)}', space=vmem, size = 0x2000, scoped, tag = 'scratch operand']
  %s0 = inlined_call_operand.vmem [shape: bf16[16,128], index: 0, kind: input, shape index: {}]
  %s1 = inlined_call_operand.vmem [shape: bf16[128,128], index: 1, kind: input, shape index: {}]
  %s2 = inlined_call_operand.vmem [shape: f32[1,128], index: 2, kind: input, shape index: {}]
  %s3 = inlined_call_operand.vmem [shape: bf16[16,128], index: 3, kind: output, shape index: {}]
  %s4 = sld [smem:[#allocation0]]
  $region30: #{classifier_forward.14} parent=0
    _
  %s6 = ssub.s32 1, %s4
  %s7 = scalar_select 0, %s6, %s4
  // Predicated region
  $region2: #{classifier_forward.14} parent=0 // pred_check
    _
  $region3: #{classifier_forward.14} parent=0 // pred_check_branch
    %9 = sbr.rel (0) target = $region5
  $region4: #{classifier_forward.14} parent=0 // pred_region
    _
  $region5: #{classifier_forward.14} parent=0 // pred_fallthru
    _
  // Predicated region
  $region6: #{classifier_forward.14} parent=0 // pred_check
    _
  $region7: #{classifier_forward.14} parent=0 // pred_check_branch
    %11 = sbr.rel (0) target = $region9
  $region8: #{classifier_forward.14} parent=0 // pred_region
    _
  $region9: #{classifier_forward.14} parent=0 // pred_fallthru
    _
  // Predicated region
  $region10: #{classifier_forward.14} parent=0 // pred_check
    _
  $region11: #{classifier_forward.14} parent=0 // pred_check_branch
    %13 = sbr.rel (0) target = $region13
  $region12: #{classifier_forward.14} parent=0 // pred_region
    _
  $region13: #{classifier_forward.14} parent=0 // pred_fallthru
    _
  %p15 = scmp.eq.s32.totalorder 0, 0
  // Predicated region
  $region14: #{classifier_forward.14} parent=0 // pred_check
    %p16 = pneg %p15
  $region15: #{classifier_forward.14} parent=0 // pred_check_branch
    %18 = sbr.rel (%p16) target = $region17
  $region16: #{classifier_forward.14} parent=0 // pred_region
    %19 = vst [vmem:[#allocation2] sm:$0xff] 0.0
    %20 = vst [vmem:[#allocation2 + $0x8] sm:$0xff] 0.0
  $region17: #{classifier_forward.14} parent=0 // pred_fallthru
    _
  %v21 = vld [vmem:[#allocation2] sm:$0xff]
  %v22 = vld [vmem:[#allocation2 + $0x8] sm:$0xff]
  %v23 = vld [vmem:[%s0] sm:$0xf]
  %v24 = vld [vmem:[%s0 + $0x4] sm:$0xf]
  %v25 = vld [vmem:[%s1] sm:$0xf]
  %v26 = vld [vmem:[%s1 + $0x4] sm:$0xf]
  %v27 = vld [vmem:[%s1 + $0x8] sm:$0xf]
  %v28 = vld [vmem:[%s1 + $0xc] sm:$0xf]
  %v29 = vld [vmem:[%s1 + $0x10] sm:$0xf]
  %v30 = vld [vmem:[%s1 + $0x14] sm:$0xf]
  %v31 = vld [vmem:[%s1 + $0x18] sm:$0xf]
  %v32 = vld [vmem:[%s1 + $0x1c] sm:$0xf]
  %v33 = vld [vmem:[%s1 + $0x20] sm:$0xf]
  %v34 = vld [vmem:[%s1 + $0x24] sm:$0xf]
  %v35 = vld [vmem:[%s1 + $0x28] sm:$0xf]
  %v36 = vld [vmem:[%s1 + $0x2c] sm:$0xf]
  %v37 = vld [vmem:[%s1 + $0x30] sm:$0xf]
  %v38 = vld [vmem:[%s1 + $0x34] sm:$0xf]
  %v39 = vld [vmem:[%s1 + $0x38] sm:$0xf]
  %v40 = vld [vmem:[%s1 + $0x3c] sm:$0xf]
  %v43 = vunpack.c.l.b16 %v23
  %v44 = vunpack.c.l.b16 %v24
  %v45 = vpack.c.b16 %v44, %v43
  %v63 = vunpack.c.l.b16 %v25
  %v64 = vunpack.c.l.b16 %v26
  %v65 = vunpack.c.l.b16 %v27
  %v66 = vunpack.c.l.b16 %v28
  %v67 = vunpack.c.l.b16 %v29
  %v68 = vunpack.c.l.b16 %v30
  %v69 = vunpack.c.l.b16 %v31
  %v70 = vunpack.c.l.b16 %v32
  %v71 = vunpack.c.l.b16 %v33
  %v72 = vunpack.c.l.b16 %v34
  %v73 = vunpack.c.l.b16 %v35
  %v74 = vunpack.c.l.b16 %v36
  %v75 = vunpack.c.l.b16 %v37
  %v76 = vunpack.c.l.b16 %v38
  %v77 = vunpack.c.l.b16 %v39
  %v78 = vunpack.c.l.b16 %v40
  %v79 = vpack.c.b16 %v64, %v63
  %v80 = vpack.c.b16 %v66, %v65
  %v81 = vpack.c.b16 %v68, %v67
  %v82 = vpack.c.b16 %v70, %v69
  %v83 = vpack.c.b16 %v72, %v71
  %v84 = vpack.c.b16 %v74, %v73
  %v85 = vpack.c.b16 %v76, %v75
  %v86 = vpack.c.b16 %v78, %v77
  %95 = vmatprep.subr.bf16.mxu0 0
  %96 = vmatpush1.bf16.msra.mxu0 %v86
  %97 = vmatprep.subr.bf16.mxu0 0
  %98 = vmatpush1.bf16.msra.mxu0 %v85
  %99 = vmatprep.subr.bf16.mxu0 0
  %100 = vmatpush1.bf16.msra.mxu0 %v84
  %101 = vmatprep.subr.bf16.mxu0 0
  %102 = vmatpush1.bf16.msra.mxu0 %v83
  %103 = vmatprep.subr.bf16.mxu0 0
  %104 = vmatpush1.bf16.msra.mxu0 %v82
  %105 = vmatprep.subr.bf16.mxu0 0
  %106 = vmatpush1.bf16.msra.mxu0 %v81
  %107 = vmatprep.subr.bf16.mxu0 0
  %108 = vmatpush1.bf16.msra.mxu0 %v80
  %109 = vmatprep.subr.bf16.mxu0 0
  %110 = vmatpush1.bf16.msra.mxu0 %v79
  %111 = vmatprep.subr.bf16.mxu0 0
  %112 = vmatpush2.bf16.msra.mxu0 0
  %113 = vmatprep.subr.bf16.mxu0 0
  %114 = vmatpush2.bf16.msra.mxu0 0
  %115 = vmatprep.subr.bf16.mxu0 0
  %116 = vmatpush2.bf16.msra.mxu0 0
  %117 = vmatprep.subr.bf16.mxu0 0
  %118 = vmatpush2.bf16.msra.mxu0 0
  %119 = vmatprep.subr.bf16.mxu0 0
  %120 = vmatpush2.bf16.msra.mxu0 0
  %121 = vmatprep.subr.bf16.mxu0 0
  %122 = vmatpush2.bf16.msra.mxu0 0
  %123 = vmatprep.subr.bf16.mxu0 0
  %124 = vmatpush2.bf16.msra.mxu0 0
  %125 = vmatprep.subr.bf16.mxu0 0
  %126 = vmatpush2.bf16.msra.mxu0 0
  %127 = vmatprep.mubr.bf16.mxu0 0
  %128 = vmatmul.mubr.bf16.gmra.mxu0 %v45
  %v129 = vpop.f32.mrf.mxu0
  %v130 = vadd.f32 0.0, %v129
  %v131 = vpop.f32.mrf.mxu0
  %v132 = vpop.f32.mrf.mxu0
  %v133 = vadd.f32 0.0, %v132
  %v134 = vpop.f32.mrf.mxu0
  %135 = vdwg.mxu0
  %v136 = vadd.f32 %v21, %v130
  %v137 = vadd.f32 %v22, %v133
  %138 = vst [vmem:[#allocation2] sm:$0xff] %v136
  %139 = vst [vmem:[#allocation2 + $0x8] sm:$0xff] %v137
  // Predicated region
  $region18: #{classifier_forward.14} parent=0 // pred_check
    %p140 = pneg %p15
  $region19: #{classifier_forward.14} parent=0 // pred_check_branch
    %142 = sbr.rel (%p140) target = $region21
  $region20: #{classifier_forward.14} parent=0 // pred_region
    %v143 = vld [vmem:[#allocation2] sm:$0xff]
    %v144 = vld [vmem:[#allocation2 + $0x8] sm:$0xff]
    %v145 = vld [vmem:[%s2] sm:$0x1]
    %v147 = vlaneseq
    %v148 = vshrl.u32 %v147, 7
    %v149 = vsub.s32 0, %v148
    %v150 = vrot.slane %v145, %v149
    %v152 = vadd.f32 %v143, %v150
    %v153 = vadd.f32 %v144, %v150
    %v154 = vpack.c.bf16 %v153, %v152
    %v156 = vunpack.c.l.b16 %v154
    %v157 = vunpack.c.h.b16 %v154
    %v158 = vpack.c.b16 %v156, %v156
    %v159 = vpack.c.b16 %v157, %v157
    %162 = vst [vmem:[%s3] sm:$0xf] %v158
    %163 = vst [vmem:[%s3 + $0x4] sm:$0xf] %v159
  $region21: #{classifier_forward.14} parent=0 // pred_fallthru
    _
  // Predicated region
  $region22: #{classifier_forward.14} parent=0 // pred_check
    _
  $region23: #{classifier_forward.14} parent=0 // pred_check_branch
    %165 = sbr.rel (0) target = $region25
  $region24: #{classifier_forward.14} parent=0 // pred_region
    _
  $region25: #{classifier_forward.14} parent=0 // pred_fallthru
    _
  // Predicated region
  $region26: #{classifier_forward.14} parent=0 // pred_check
    _
  $region27: #{classifier_forward.14} parent=0 // pred_check_branch
    %167 = sbr.rel (0) target = $region29
  $region28: #{classifier_forward.14} parent=0 // pred_region
    _
  $region29: #{classifier_forward.14} parent=0 // pred_fallthru
    _

// kernel: classifier_forward.16
$region0: #{classifier_forward.16}
  #allocation0 [shape = 'u32[]', space=smem, size = 0x4, offset = 0x4, fixed_abs, tag = 'smem constant byte address 0x4 - core index']
  #allocation1 [shape = 'u32[144,128]{1,0:T(1,128)}', space=vmem, size = 0x12000, scoped, tag = 'internal scratch']
  #allocation2 [shape = 'f32[8,128]{1,0:T(8,128)}', space=vmem, size = 0x1000, scoped, tag = 'scratch operand']
  %s0 = inlined_call_operand.vmem [shape: bf16[16,128], index: 0, kind: input, shape index: {}]
  %s1 = inlined_call_operand.vmem [shape: bf16[128,128], index: 1, kind: input, shape index: {}]
  %s2 = inlined_call_operand.vmem [shape: f32[1,128], index: 2, kind: input, shape index: {}]
  %s3 = inlined_call_operand.vmem [shape: bf16[16,128], index: 3, kind: input, shape index: {}]
  %s4 = inlined_call_operand.vmem [shape: f32[1,128], index: 4, kind: input, shape index: {}]
  %s5 = inlined_call_operand.vmem [shape: f32[1,128], index: 5, kind: input, shape index: {}]
  %s6 = inlined_call_operand.vmem [shape: bf16[16,128], index: 6, kind: output, shape index: {}]
  %s7 = sld [smem:[#allocation0]]
  $region65: #{classifier_forward.16} parent=0
    _
  %s9 = ssub.s32 1, %s7
  %s10 = scalar_select 0, %s9, %s7
  loop: start=0, step=1, limit=4
  $region2: #{classifier_forward.16} parent=0 // loop_pre_header
    _
  $region3: #{classifier_forward.16} parent=0 // loop_header
    %s12 = sphi 0, %s16
    %p13 = scmp.ge.s32.totalorder %s12, 4
    %s19 = sphi 0, %s38
    %s20 = sphi 0, %s34
    %s21 = sphi 0, %s30
    %s22 = sphi 0, %s19
    %s23 = sphi 0, %s20
    %s24 = sphi 0, %s21
    %s25 = sphi 0, %s22
    %s26 = sphi 0, %s23
    %s27 = sphi 0, %s24
    %s43 = sphi 0, %s45
    %s46 = sphi 0, %s43
    %s47 = sphi 0, %s46
    %s63 = sphi 0, %s47
    %s71 = sphi 0, %s73
    %s74 = sphi 0, %s71
    %s75 = sphi 0, %s74
    %s91 = sphi 0, %s75
    %s97 = sphi 0, %s99
    %s100 = sphi 0, %s97
    %s101 = sphi 0, %s100
    %s117 = sphi 0, %s101
    %s125 = sphi 0, %s127
    %s128 = sphi 0, %s125
    %s129 = sphi 0, %s128
    %s145 = sphi 0, %s129
    %s151 = sphi 0, %s153
    %s154 = sphi 0, %s151
    %s155 = sphi 0, %s154
    %s171 = sphi 0, %s155
    %s177 = sphi 0, %s179
    %s180 = sphi 0, %s177
    %s181 = sphi 0, %s180
    %s197 = sphi 0, %s181
    %s205 = sphi 0, %s207
    %s208 = sphi 0, %s205
    %s209 = sphi 0, %s208
    %s225 = sphi 0, %s209
  $region4: #{classifier_forward.16} parent=0 // loop_header_branch
    %15 = sbr.rel (%p13) target = $region8
  $region5: #{classifier_forward.16} parent=0 // loop_body
    %s17 = ssub.s32 %s12, 1
    %s18 = ssub.s32 %s12, 2
    %s28 = sadd.s32 1, %s21
    %p29 = scmp.ge.s32.totalorder %s28, 1
    %s30 = scalar_select %p29, 0, %s28
    %s31 = sadd.s32 1, %s20
    %s32 = scalar_select %p29, %s31, %s20
    %p33 = scmp.ge.s32.totalorder %s32, 1
    %s34 = scalar_select %p33, 0, %s32
    %s35 = sadd.s32 1, %s19
    %s36 = scalar_select %p33, %s35, %s19
    %p37 = scmp.ge.s32.totalorder %s36, 2
    %s38 = scalar_select %p37, 0, %s36
    %s39 = ssub.s32 %s19, %s38
    %s40 = ssub.s32 %s21, %s30
    %s41 = sor.u32 %s39, %s40
    %p42 = scmp.eq.s32.totalorder %s41, 0
    %s44 = sadd.s32 %s43, 1
    %s45 = scalar_select %p42, %s43, %s44
    %p48 = pneg %p42
    %p49 = scmp.eq.s32.totalorder %s12, 1
    %p50 = por %p48, %p49
    %p51 = scmp.ne.s32.totalorder %s43, %s46
    %p52 = scmp.eq.s32.totalorder %s12, 0
    %p53 = por %p51, %p52
    %p54 = scmp.ne.s32.totalorder %s43, %s46
    %p55 = scmp.eq.s32.totalorder %s17, 1
    %p56 = por %p54, %p55
    %p57 = scmp.ne.s32.totalorder %s46, %s47
    %p58 = scmp.eq.s32.totalorder %s17, 0
    %p59 = por %p57, %p58
    %p60 = scmp.ne.s32.totalorder %s46, %s47
    %p61 = scmp.eq.s32.totalorder %s18, 1
    %p62 = por %p60, %p61
    %p64 = scmp.ne.s32.totalorder %s47, %s63
    %p65 = scmp.eq.s32.totalorder %s18, 0
    %p66 = por %p64, %p65
    %s67 = ssub.s32 %s21, %s30
    %s68 = ssub.s32 %s20, %s34
    %s69 = sor.u32 %s67, %s68
    %p70 = scmp.eq.s32.totalorder %s69, 0
    %s72 = sadd.s32 %s71, 1
    %s73 = scalar_select %p70, %s71, %s72
    %p76 = pneg %p70
    %p77 = scmp.eq.s32.totalorder %s12, 1
    %p78 = por %p76, %p77
    %p79 = scmp.ne.s32.totalorder %s71, %s74
    %p80 = scmp.eq.s32.totalorder %s12, 0
    %p81 = por %p79, %p80
    %p82 = scmp.ne.s32.totalorder %s71, %s74
    %p83 = scmp.eq.s32.totalorder %s17, 1
    %p84 = por %p82, %p83
    %p85 = scmp.ne.s32.totalorder %s74, %s75
    %p86 = scmp.eq.s32.totalorder %s17, 0
    %p87 = por %p85, %p86
    %p88 = scmp.ne.s32.totalorder %s74, %s75
    %p89 = scmp.eq.s32.totalorder %s18, 1
    %p90 = por %p88, %p89
    %p92 = scmp.ne.s32.totalorder %s75, %s91
    %p93 = scmp.eq.s32.totalorder %s18, 0
    %p94 = por %p92, %p93
    %s95 = ssub.s32 %s20, %s34
    %p96 = scmp.eq.s32.totalorder %s95, 0
    %s98 = sadd.s32 %s97, 1
    %s99 = scalar_select %p96, %s97, %s98
    %p102 = pneg %p96
    %p103 = scmp.eq.s32.totalorder %s12, 1
    %p104 = por %p102, %p103
    %p105 = scmp.ne.s32.totalorder %s97, %s100
    %p106 = scmp.eq.s32.totalorder %s12, 0
    %p107 = por %p105, %p106
    %p108 = scmp.ne.s32.totalorder %s97, %s100
    %p109 = scmp.eq.s32.totalorder %s17, 1
    %p110 = por %p108, %p109
    %p111 = scmp.ne.s32.totalorder %s100, %s101
    %p112 = scmp.eq.s32.totalorder %s17, 0
    %p113 = por %p111, %p112
    %p114 = scmp.ne.s32.totalorder %s100, %s101
    %p115 = scmp.eq.s32.totalorder %s18, 1
    %p116 = por %p114, %p115
    %p118 = scmp.ne.s32.totalorder %s101, %s117
    %p119 = scmp.eq.s32.totalorder %s18, 0
    %p120 = por %p118, %p119
    %s121 = ssub.s32 %s19, %s38
    %s122 = ssub.s32 %s20, %s34
    %s123 = sor.u32 %s121, %s122
    %p124 = scmp.eq.s32.totalorder %s123, 0
    %s126 = sadd.s32 %s125, 1
    %s127 = scalar_select %p124, %s125, %s126
    %p130 = pneg %p124
    %p131 = scmp.eq.s32.totalorder %s12, 1
    %p132 = por %p130, %p131
    %p133 = scmp.ne.s32.totalorder %s125, %s128
    %p134 = scmp.eq.s32.totalorder %s12, 0
    %p135 = por %p133, %p134
    %p136 = scmp.ne.s32.totalorder %s125, %s128
    %p137 = scmp.eq.s32.totalorder %s17, 1
    %p138 = por %p136, %p137
    %p139 = scmp.ne.s32.totalorder %s128, %s129
    %p140 = scmp.eq.s32.totalorder %s17, 0
    %p141 = por %p139, %p140
    %p142 = scmp.ne.s32.totalorder %s128, %s129
    %p143 = scmp.eq.s32.totalorder %s18, 1
    %p144 = por %p142, %p143
    %p146 = scmp.ne.s32.totalorder %s129, %s145
    %p147 = scmp.eq.s32.totalorder %s18, 0
    %p148 = por %p146, %p147
    %s149 = ssub.s32 %s20, %s34
    %p150 = scmp.eq.s32.totalorder %s149, 0
    %s152 = sadd.s32 %s151, 1
    %s153 = scalar_select %p150, %s151, %s152
    %p156 = pneg %p150
    %p157 = scmp.eq.s32.totalorder %s12, 1
    %p158 = por %p156, %p157
    %p159 = scmp.ne.s32.totalorder %s151, %s154
    %p160 = scmp.eq.s32.totalorder %s12, 0
    %p161 = por %p159, %p160
    %p162 = scmp.ne.s32.totalorder %s151, %s154
    %p163 = scmp.eq.s32.totalorder %s17, 1
    %p164 = por %p162, %p163
    %p165 = scmp.ne.s32.totalorder %s154, %s155
    %p166 = scmp.eq.s32.totalorder %s17, 0
    %p167 = por %p165, %p166
    %p168 = scmp.ne.s32.totalorder %s154, %s155
    %p169 = scmp.eq.s32.totalorder %s18, 1
    %p170 = por %p168, %p169
    %p172 = scmp.ne.s32.totalorder %s155, %s171
    %p173 = scmp.eq.s32.totalorder %s18, 0
    %p174 = por %p172, %p173
    %s175 = ssub.s32 %s20, %s34
    %p176 = scmp.eq.s32.totalorder %s175, 0
    %s178 = sadd.s32 %s177, 1
    %s179 = scalar_select %p176, %s177, %s178
    %p182 = pneg %p176
    %p183 = scmp.eq.s32.totalorder %s12, 1
    %p184 = por %p182, %p183
    %p185 = scmp.ne.s32.totalorder %s177, %s180
    %p186 = scmp.eq.s32.totalorder %s12, 0
    %p187 = por %p185, %p186
    %p188 = scmp.ne.s32.totalorder %s177, %s180
    %p189 = scmp.eq.s32.totalorder %s17, 1
    %p190 = por %p188, %p189
    %p191 = scmp.ne.s32.totalorder %s180, %s181
    %p192 = scmp.eq.s32.totalorder %s17, 0
    %p193 = por %p191, %p192
    %p194 = scmp.ne.s32.totalorder %s180, %s181
    %p195 = scmp.eq.s32.totalorder %s18, 1
    %p196 = por %p194, %p195
    %p198 = scmp.ne.s32.totalorder %s181, %s197
    %p199 = scmp.eq.s32.totalorder %s18, 0
    %p200 = por %p198, %p199
    %s201 = ssub.s32 %s19, %s38
    %s202 = ssub.s32 %s20, %s34
    %s203 = sor.u32 %s201, %s202
    %p204 = scmp.eq.s32.totalorder %s203, 0
    %s206 = sadd.s32 %s205, 1
    %s207 = scalar_select %p204, %s205, %s206
    %p210 = pneg %p204
    %p211 = scmp.eq.s32.totalorder %s12, 1
    %p212 = por %p210, %p211
    %p213 = scmp.ne.s32.totalorder %s205, %s208
    %p214 = scmp.eq.s32.totalorder %s12, 0
    %p215 = por %p213, %p214
    %p216 = scmp.ne.s32.totalorder %s205, %s208
    %p217 = scmp.eq.s32.totalorder %s17, 1
    %p218 = por %p216, %p217
    %p219 = scmp.ne.s32.totalorder %s208, %s209
    %p220 = scmp.eq.s32.totalorder %s17, 0
    %p221 = por %p219, %p220
    %p222 = scmp.ne.s32.totalorder %s208, %s209
    %p223 = scmp.eq.s32.totalorder %s18, 1
    %p224 = por %p222, %p223
    %p226 = scmp.ne.s32.totalorder %s209, %s225
    %p227 = scmp.eq.s32.totalorder %s18, 0
    %p228 = por %p226, %p227
    %p229 = scmp.le.s32.totalorder 1, %s12
    %p230 = scmp.lt.s32.totalorder %s12, 3
    %p231 = pnand %p229, %p230
    %p232 = pneg %p231
    // Predicated region
    $region9: #{classifier_forward.16} parent=5 // pred_check
      _
    $region10: #{classifier_forward.16} parent=5 // pred_check_branch
      %234 = sbr.rel (%p231) target = $region12
    $region11: #{classifier_forward.16} parent=5 // pred_region
      %s235 = ssub.s32 %s12, 1
      // Predicated region
      $region13: #{classifier_forward.16} parent=11 // pred_check
        %p236 = pneg %p87
      $region14: #{classifier_forward.16} parent=11 // pred_check_branch
        %238 = sbr.rel (%p236) target = $region16
      $region15: #{classifier_forward.16} parent=11 // pred_region
        %s239 = smul.u32 16, %s24
        %p240 = scmp.lt.s32.totalorder %s239, 15
        %s241 = scalar_select %p240, %s239, 15
        %p242 = scmp.lt.s32.totalorder %s23, 0
        %s243 = scalar_select %p242, %s23, 0
        %s244 = sadd.s32 %s243, %s241
        %s245 = smul.addr %s244, 4
        %s246 = scalar_lea.vmem %s1, %s245
        %s247 = smul.u32 16, %s24
      $region16: #{classifier_forward.16} parent=11 // pred_fallthru
        _
      // Predicated region
      $region17: #{classifier_forward.16} parent=11 // pred_check
        %p248 = pneg %p113
      $region18: #{classifier_forward.16} parent=11 // pred_check_branch
        %250 = sbr.rel (%p248) target = $region20
      $region19: #{classifier_forward.16} parent=11 // pred_region
        %p251 = scmp.lt.s32.totalorder %s23, 0
        %s252 = scalar_select %p251, %s23, 0
        %s253 = scalar_lea.vmem %s2, %s252
      $region20: #{classifier_forward.16} parent=11 // pred_fallthru
        _
      // Predicated region
      $region21: #{classifier_forward.16} parent=11 // pred_check
        %p254 = pneg %p167
      $region22: #{classifier_forward.16} parent=11 // pred_check_branch
        %256 = sbr.rel (%p254) target = $region24
      $region23: #{classifier_forward.16} parent=11 // pred_region
        %p257 = scmp.lt.s32.totalorder %s23, 0
        %s258 = scalar_select %p257, %s23, 0
        %s259 = scalar_lea.vmem %s4, %s258
      $region24: #{classifier_forward.16} parent=11 // pred_fallthru
        _
      // Predicated region
      $region25: #{classifier_forward.16} parent=11 // pred_check
        %p260 = pneg %p193
      $region26: #{classifier_forward.16} parent=11 // pred_check_branch
        %262 = sbr.rel (%p260) target = $region28
      $region27: #{classifier_forward.16} parent=11 // pred_region
        %p263 = scmp.lt.s32.totalorder %s23, 0
        %s264 = scalar_select %p263, %s23, 0
        %s265 = scalar_lea.vmem %s5, %s264
      $region28: #{classifier_forward.16} parent=11 // pred_fallthru
        _
    $region12: #{classifier_forward.16} parent=5 // pred_fallthru
      _
    %p266 = scmp.lt.s32.totalorder %s12, 2
    // Predicated region
    $region29: #{classifier_forward.16} parent=5 // pred_check
      %p267 = pneg %p266
    $region30: #{classifier_forward.16} parent=5 // pred_check_branch
      %269 = sbr.rel (%p267) target = $region32
    $region31: #{classifier_forward.16} parent=5 // pred_region
      // Predicated region
      $region33: #{classifier_forward.16} parent=31 // pred_check
        %p270 = pneg %p53
      $region34: #{classifier_forward.16} parent=31 // pred_check_branch
        %272 = sbr.rel (%p270) target = $region36
      $region35: #{classifier_forward.16} parent=31 // pred_region
        %p273 = scmp.lt.s32.totalorder %s19, 1
        %s274 = scalar_select %p273, %s19, 1
        %p275 = scmp.lt.s32.totalorder %s21, 0
        %s276 = scalar_select %p275, %s21, 0
        %s277 = sadd.s32 %s276, %s274
        %s278 = smul.addr %s277, 4
        %s279 = scalar_lea.vmem %s0, %s278
      $region36: #{classifier_forward.16} parent=31 // pred_fallthru
        _
      // Predicated region
      $region37: #{classifier_forward.16} parent=31 // pred_check
        %p280 = pneg %p135
      $region38: #{classifier_forward.16} parent=31 // pred_check_branch
        %282 = sbr.rel (%p280) target = $region40
      $region39: #{classifier_forward.16} parent=31 // pred_region
        %p283 = scmp.lt.s32.totalorder %s19, 1
        %s284 = scalar_select %p283, %s19, 1
        %p285 = scmp.lt.s32.totalorder %s20, 0
        %s286 = scalar_select %p285, %s20, 0
        %s287 = sadd.s32 %s286, %s284
        %s288 = smul.addr %s287, 4
        %s289 = scalar_lea.vmem %s3, %s288
      $region40: #{classifier_forward.16} parent=31 // pred_fallthru
        _
    $region32: #{classifier_forward.16} parent=5 // pred_fallthru
      _
    %p290 = scmp.le.s32.totalorder 1, %s12
    %p291 = scmp.lt.s32.totalorder %s12, 3
    %p292 = pnand %p290, %p291
    %p293 = pneg %p292
    // Predicated region
    $region41: #{classifier_forward.16} parent=5 // pred_check
      _
    $region42: #{classifier_forward.16} parent=5 // pred_check_branch
      %295 = sbr.rel (%p292) target = $region44
    $region43: #{classifier_forward.16} parent=5 // pred_region
      %s296 = ssub.s32 %s12, 1
      %p297 = scmp.lt.s32.totalorder %s22, 1
      %s298 = scalar_select %p297, %s22, 1
      %p299 = scmp.lt.s32.totalorder %s24, 0
      %s300 = scalar_select %p299, %s24, 0
      %s301 = sadd.s32 %s300, %s298
      %s302 = smul.addr %s301, 4
      %s303 = scalar_lea.vmem %s0, %s302
      %p304 = pneg %p59
      %p305 = pneg %p56
      %s306 = smul.u32 16, %s24
      %p307 = scmp.lt.s32.totalorder %s306, 15
      %s308 = scalar_select %p307, %s306, 15
      %p309 = scmp.lt.s32.totalorder %s23, 0
      %s310 = scalar_select %p309, %s23, 0
      %s311 = sadd.s32 %s310, %s308
      %s312 = smul.addr %s311, 4
      %s313 = scalar_lea.vmem %s1, %s312
      %p314 = pneg %p87
      %p315 = pneg %p84
      %p316 = scmp.lt.s32.totalorder %s23, 0
      %s317 = scalar_select %p316, %s23, 0
      %s318 = scalar_lea.vmem %s2, %s317
      %p319 = pneg %p113
      %p320 = pneg %p110
      %p321 = scmp.lt.s32.totalorder %s22, 1
      %s322 = scalar_select %p321, %s22, 1
      %p323 = scmp.lt.s32.totalorder %s23, 0
      %s324 = scalar_select %p323, %s23, 0
      %s325 = sadd.s32 %s324, %s322
      %s326 = smul.addr %s325, 4
      %s327 = scalar_lea.vmem %s3, %s326
      %p328 = pneg %p141
      %p329 = pneg %p138
      %p330 = scmp.lt.s32.totalorder %s23, 0
      %s331 = scalar_select %p330, %s23, 0
      %s332 = scalar_lea.vmem %s4, %s331
      %p333 = pneg %p167
      %p334 = pneg %p164
      %p335 = scmp.lt.s32.totalorder %s23, 0
      %s336 = scalar_select %p335, %s23, 0
      %s337 = scalar_lea.vmem %s5, %s336
      %p338 = pneg %p193
      %p339 = pneg %p190
      %p340 = pneg %p221
      %p341 = pneg %p218
      %p342 = scmp.lt.s32.totalorder %s22, 1
      %s343 = scalar_select %p342, %s22, 1
      %p344 = scmp.lt.s32.totalorder %s23, 0
      %s345 = scalar_select %p344, %s23, 0
      %s346 = sadd.s32 %s345, %s343
      %s347 = smul.addr %s346, 4
      %s348 = scalar_lea.vmem %s6, %s347
      %p349 = scmp.lt.s32.totalorder %s22, 1
      %s350 = scalar_select %p349, %s22, 1
      %p351 = scmp.lt.s32.totalorder %s24, 0
      %s352 = scalar_select %p351, %s24, 0
      %s353 = sadd.s32 %s352, %s350
      %s354 = smul.addr %s353, 4
      %s355 = scalar_lea.vmem %s0, %s354
      %s356 = smul.u32 16, %s24
      %p357 = scmp.lt.s32.totalorder %s356, 15
      %s358 = scalar_select %p357, %s356, 15
      %p359 = scmp.lt.s32.totalorder %s23, 0
      %s360 = scalar_select %p359, %s23, 0
      %s361 = sadd.s32 %s360, %s358
      %s362 = smul.addr %s361, 4
      %s363 = scalar_lea.vmem %s1, %s362
      %s364 = smul.u32 16, %s24
      %p365 = scmp.lt.s32.totalorder %s23, 0
      %s366 = scalar_select %p365, %s23, 0
      %s367 = scalar_lea.vmem %s2, %s366
      %p368 = scmp.lt.s32.totalorder %s22, 1
      %s369 = scalar_select %p368, %s22, 1
      %p370 = scmp.lt.s32.totalorder %s23, 0
      %s371 = scalar_select %p370, %s23, 0
      %s372 = sadd.s32 %s371, %s369
      %s373 = smul.addr %s372, 4
      %s374 = scalar_lea.vmem %s3, %s373
      %p375 = scmp.lt.s32.totalorder %s23, 0
      %s376 = scalar_select %p375, %s23, 0
      %s377 = scalar_lea.vmem %s4, %s376
      %p378 = scmp.lt.s32.totalorder %s23, 0
      %s379 = scalar_select %p378, %s23, 0
      %s380 = scalar_lea.vmem %s5, %s379
      %p381 = scmp.lt.s32.totalorder %s22, 1
      %s382 = scalar_select %p381, %s22, 1
      %p383 = scmp.lt.s32.totalorder %s23, 0
      %s384 = scalar_select %p383, %s23, 0
      %s385 = sadd.s32 %s384, %s382
      %s386 = smul.addr %s385, 4
      %s387 = scalar_lea.vmem %s6, %s386
      %p389 = scmp.eq.s32.totalorder %s24, 0
      // Predicated region
      $region45: #{classifier_forward.16} parent=43 // pred_check
        %p390 = pneg %p389
      $region46: #{classifier_forward.16} parent=43 // pred_check_branch
        %392 = sbr.rel (%p390) target = $region48
      $region47: #{classifier_forward.16} parent=43 // pred_region
        %393 = vst [vmem:[#allocation2] sm:$0xff] 0.0
      $region48: #{classifier_forward.16} parent=43 // pred_fallthru
        _
      %v394 = vld [vmem:[#allocation2] sm:$0xff]
      %v395 = vld [vmem:[%s355] sm:$0xf]
      %v396 = vld [vmem:[%s363] sm:$0xf]
      %v397 = vld [vmem:[%s363 + $0x4] sm:$0xf]
      %v398 = vld [vmem:[%s363 + $0x8] sm:$0xf]
      %v399 = vld [vmem:[%s363 + $0xc] sm:$0xf]
      %v400 = vld [vmem:[%s363 + $0x10] sm:$0xf]
      %v401 = vld [vmem:[%s363 + $0x14] sm:$0xf]
      %v402 = vld [vmem:[%s363 + $0x18] sm:$0xf]
      %v403 = vld [vmem:[%s363 + $0x1c] sm:$0xf]
      %v404 = vld [vmem:[%s363 + $0x20] sm:$0xf]
      %v405 = vld [vmem:[%s363 + $0x24] sm:$0xf]
      %v406 = vld [vmem:[%s363 + $0x28] sm:$0xf]
      %v407 = vld [vmem:[%s363 + $0x2c] sm:$0xf]
      %v408 = vld [vmem:[%s363 + $0x30] sm:$0xf]
      %v409 = vld [vmem:[%s363 + $0x34] sm:$0xf]
      %v410 = vld [vmem:[%s363 + $0x38] sm:$0xf]
      %v411 = vld [vmem:[%s363 + $0x3c] sm:$0xf]
      %v428 = vunpack.c.l.b16 %v396
      %v429 = vunpack.c.l.b16 %v397
      %v430 = vunpack.c.l.b16 %v398
      %v431 = vunpack.c.l.b16 %v399
      %v432 = vunpack.c.l.b16 %v400
      %v433 = vunpack.c.l.b16 %v401
      %v434 = vunpack.c.l.b16 %v402
      %v435 = vunpack.c.l.b16 %v403
      %v436 = vunpack.c.l.b16 %v404
      %v437 = vunpack.c.l.b16 %v405
      %v438 = vunpack.c.l.b16 %v406
      %v439 = vunpack.c.l.b16 %v407
      %v440 = vunpack.c.l.b16 %v408
      %v441 = vunpack.c.l.b16 %v409
      %v442 = vunpack.c.l.b16 %v410
      %v443 = vunpack.c.l.b16 %v411
      %v444 = vpack.c.b16 %v429, %v428
      %v445 = vpack.c.b16 %v431, %v430
      %v446 = vpack.c.b16 %v433, %v432
      %v447 = vpack.c.b16 %v435, %v434
      %v448 = vpack.c.b16 %v437, %v436
      %v449 = vpack.c.b16 %v439, %v438
      %v450 = vpack.c.b16 %v441, %v440
      %v451 = vpack.c.b16 %v443, %v442
      %460 = vmatprep.subr.bf16.mxu0 0
      %461 = vmatpush1.bf16.msra.mxu0 %v451
      %462 = vmatprep.subr.bf16.mxu0 0
      %463 = vmatpush1.bf16.msra.mxu0 %v450
      %464 = vmatprep.subr.bf16.mxu0 0
      %465 = vmatpush1.bf16.msra.mxu0 %v449
      %466 = vmatprep.subr.bf16.mxu0 0
      %467 = vmatpush1.bf16.msra.mxu0 %v448
      %468 = vmatprep.subr.bf16.mxu0 0
      %469 = vmatpush1.bf16.msra.mxu0 %v447
      %470 = vmatprep.subr.bf16.mxu0 0
      %471 = vmatpush1.bf16.msra.mxu0 %v446
      %472 = vmatprep.subr.bf16.mxu0 0
      %473 = vmatpush1.bf16.msra.mxu0 %v445
      %474 = vmatprep.subr.bf16.mxu0 0
      %475 = vmatpush1.bf16.msra.mxu0 %v444
      %476 = vmatprep.subr.bf16.mxu0 0
      %477 = vmatpush2.bf16.msra.mxu0 0
      %478 = vmatprep.subr.bf16.mxu0 0
      %479 = vmatpush2.bf16.msra.mxu0 0
      %480 = vmatprep.subr.bf16.mxu0 0
      %481 = vmatpush2.bf16.msra.mxu0 0
      %482 = vmatprep.subr.bf16.mxu0 0
      %483 = vmatpush2.bf16.msra.mxu0 0
      %484 = vmatprep.subr.bf16.mxu0 0
      %485 = vmatpush2.bf16.msra.mxu0 0
      %486 = vmatprep.subr.bf16.mxu0 0
      %487 = vmatpush2.bf16.msra.mxu0 0
      %488 = vmatprep.subr.bf16.mxu0 0
      %489 = vmatpush2.bf16.msra.mxu0 0
      %490 = vmatprep.subr.bf16.mxu0 0
      %491 = vmatpush2.bf16.msra.mxu0 0
      %492 = vmatprep.mubr.bf16.mxu0 0
      %493 = vmatmul.mubr.bf16.gmra.mxu0 %v395
      %v494 = vpop.f32.mrf.mxu0
      %v495 = vadd.f32 0.0, %v494
      %v496 = vpop.f32.mrf.mxu0
      %v497 = vpop.f32.mrf.mxu0
      %v498 = vpop.f32.mrf.mxu0
      %499 = vdwg.mxu0
      %v500 = vadd.f32 %v394, %v495
      %501 = vst [vmem:[#allocation2] sm:$0xff] %v500
      // Predicated region
      $region49: #{classifier_forward.16} parent=43 // pred_check
        %p502 = pneg %p389
      $region50: #{classifier_forward.16} parent=43 // pred_check_branch
        %504 = sbr.rel (%p502) target = $region52
      $region51: #{classifier_forward.16} parent=43 // pred_region
        %v505 = vld [vmem:[#allocation2] sm:$0xff]
        %v506 = vld [vmem:[%s367] sm:$0x1]
        %v508 = vlaneseq
        %v509 = vshrl.u32 %v508, 7
        %v510 = vsub.s32 0, %v509
        %v511 = vrot.slane %v506, %v510
        %v513 = vadd.f32 %v505, %v511
        %v514 = vld [vmem:[%s374] sm:$0xf]
        %v515 = vunpack.c.l.bf16 %v514
        %v516 = vadd.f32 %v513, %v515
        %v517 = vlaneseq
        %v518 = vand.u32 %v517, 127
        %vm519 = vcmp.lt.s32.totalorder %v518, 32
        %v520 = vsel %vm519, %v516, 0.0
        %521 = vadd.xlane.f32.xlu0 %v520
        %v522 = vpop.xlane.xlu0 %521
        %v523 = vrcp.pop 32.0
        %v524 = vmul.f32 %v522, %v523
        %v525 = vsub.f32 %v516, %v524
        %v526 = vsel %vm519, %v525, 0.0
        %v527 = vmul.f32 %v526, %v526
        %528 = vadd.xlane.f32.xlu0 %v527
        %v529 = vpop.xlane.xlu0 %528
        %v530 = vmul.f32 %v529, %v523
        %v531 = vadd.f32 %v530, 1e-12
        %v532 = vrsqrt.pop %v531
        %v533 = vmul.f32 %v525, %v532
        %v534 = vld [vmem:[%s377] sm:$0x1]
        %v536 = vlaneseq
        %v537 = vshrl.u32 %v536, 7
        %v538 = vsub.s32 0, %v537
        %v539 = vrot.slane %v534, %v538
        %v541 = vmul.f32 %v533, %v539
        %v542 = vld [vmem:[%s380] sm:$0x1]
        %v544 = vlaneseq
        %v545 = vshrl.u32 %v544, 7
        %v546 = vsub.s32 0, %v545
        %v547 = vrot.slane %v542, %v546
        %v549 = vadd.f32 %v541, %v547
        %v550 = vpack.c.bf16 %v549, %v549
        %551 = vst [vmem:[%s387] sm:$0xf] %v550
      $region52: #{classifier_forward.16} parent=43 // pred_fallthru
        _
      %p552 = scmp.lt.s32.totalorder %s22, 1
      %s553 = scalar_select %p552, %s22, 1
      %p554 = scmp.lt.s32.totalorder %s23, 0
      %s555 = scalar_select %p554, %s23, 0
      %s556 = sadd.s32 %s555, %s553
      %s557 = smul.addr %s556, 4
      %s558 = scalar_lea.vmem %s6, %s557
      // Predicated region
      $region53: #{classifier_forward.16} parent=43 // pred_check
        %p559 = pneg %p218
      $region54: #{classifier_forward.16} parent=43 // pred_check_branch
        %561 = sbr.rel (%p559) target = $region56
      $region55: #{classifier_forward.16} parent=43 // pred_region
        _
      $region56: #{classifier_forward.16} parent=43 // pred_fallthru
        _
    $region44: #{classifier_forward.16} parent=5 // pred_fallthru
      _
    %p562 = scmp.le.s32.totalorder 2, %s12
    // Predicated region
    $region57: #{classifier_forward.16} parent=5 // pred_check
      %p563 = pneg %p562
    $region58: #{classifier_forward.16} parent=5 // pred_check_branch
      %565 = sbr.rel (%p563) target = $region60
    $region59: #{classifier_forward.16} parent=5 // pred_region
      %s566 = ssub.s32 %s12, 2
      // Predicated region
      $region61: #{classifier_forward.16} parent=59 // pred_check
        %p567 = pneg %p224
      $region62: #{classifier_forward.16} parent=59 // pred_check_branch
        %569 = sbr.rel (%p567) target = $region64
      $region63: #{classifier_forward.16} parent=59 // pred_region
        %p570 = scmp.lt.s32.totalorder %s25, 1
        %s571 = scalar_select %p570, %s25, 1
        %p572 = scmp.lt.s32.totalorder %s26, 0
        %s573 = scalar_select %p572, %s26, 0
        %s574 = sadd.s32 %s573, %s571
        %s575 = smul.addr %s574, 4
        %s576 = scalar_lea.vmem %s6, %s575
      $region64: #{classifier_forward.16} parent=59 // pred_fallthru
        _
    $region60: #{classifier_forward.16} parent=5 // pred_fallthru
      _
  $region6: #{classifier_forward.16} parent=0 // loop_footer
    %s16 = sadd.s32 1, %s12
  $region7: #{classifier_forward.16} parent=0 // loop_footer_branch
    %11 = sbr.rel target = $region3
  $region8: #{classifier_forward.16} parent=0 // loop_exit
    _

// kernel: classifier_forward.15
$region0: #{classifier_forward.15}
  #allocation0 [shape = 'u32[]', space=smem, size = 0x4, offset = 0x4, fixed_abs, tag = 'smem constant byte address 0x4 - core index']
  #allocation1 [shape = 'u32[144,128]{1,0:T(1,128)}', space=vmem, size = 0x12000, scoped, tag = 'internal scratch']
  %s0 = inlined_call_operand.vmem [shape: bf16[16,128], index: 0, kind: input, shape index: {}]
  %s1 = inlined_call_operand.vmem [shape: f32[2,1,8], index: 1, kind: input, shape index: {}]
  %s2 = inlined_call_operand.vmem [shape: bf16[16,128], index: 2, kind: output, shape index: {}]
  %s3 = sld [smem:[#allocation0]]
  $region41: #{classifier_forward.15} parent=0
    _
  %s5 = ssub.s32 1, %s3
  %s6 = scalar_select 0, %s5, %s3
  loop: start=0, step=1, limit=4
  $region2: #{classifier_forward.15} parent=0 // loop_pre_header
    _
  $region3: #{classifier_forward.15} parent=0 // loop_header
    %s8 = sphi 0, %s12
    %p9 = scmp.ge.s32.totalorder %s8, 4
    %s18 = sphi 0, %s20
    %s21 = sphi 0, %s18
    %s22 = sphi 0, %s21
    %s38 = sphi 0, %s22
    %s44 = sphi 0, %s46
    %s47 = sphi 0, %s44
    %s48 = sphi 0, %s47
    %s64 = sphi 0, %s48
    %s70 = sphi 0, %s72
    %s73 = sphi 0, %s70
    %s74 = sphi 0, %s73
    %s90 = sphi 0, %s74
  $region4: #{classifier_forward.15} parent=0 // loop_header_branch
    %11 = sbr.rel (%p9) target = $region8
  $region5: #{classifier_forward.15} parent=0 // loop_body
    %s13 = ssub.s32 %s8, 1
    %s14 = ssub.s32 %s8, 2
    %s15 = sadd.s32 %s8, 1
    %s16 = ssub.s32 %s8, %s15
    %p17 = scmp.eq.s32.totalorder %s16, 0
    %s19 = sadd.s32 %s18, 1
    %s20 = scalar_select %p17, %s18, %s19
    %p23 = pneg %p17
    %p24 = scmp.eq.s32.totalorder %s8, 1
    %p25 = por %p23, %p24
    %p26 = scmp.ne.s32.totalorder %s18, %s21
    %p27 = scmp.eq.s32.totalorder %s8, 0
    %p28 = por %p26, %p27
    %p29 = scmp.ne.s32.totalorder %s18, %s21
    %p30 = scmp.eq.s32.totalorder %s13, 1
    %p31 = por %p29, %p30
    %p32 = scmp.ne.s32.totalorder %s21, %s22
    %p33 = scmp.eq.s32.totalorder %s13, 0
    %p34 = por %p32, %p33
    %p35 = scmp.ne.s32.totalorder %s21, %s22
    %p36 = scmp.eq.s32.totalorder %s14, 1
    %p37 = por %p35, %p36
    %p39 = scmp.ne.s32.totalorder %s22, %s38
    %p40 = scmp.eq.s32.totalorder %s14, 0
    %p41 = por %p39, %p40
    %s42 = ssub.s32 %s8, %s15
    %p43 = scmp.eq.s32.totalorder %s42, 0
    %s45 = sadd.s32 %s44, 1
    %s46 = scalar_select %p43, %s44, %s45
    %p49 = pneg %p43
    %p50 = scmp.eq.s32.totalorder %s8, 1
    %p51 = por %p49, %p50
    %p52 = scmp.ne.s32.totalorder %s44, %s47
    %p53 = scmp.eq.s32.totalorder %s8, 0
    %p54 = por %p52, %p53
    %p55 = scmp.ne.s32.totalorder %s44, %s47
    %p56 = scmp.eq.s32.totalorder %s13, 1
    %p57 = por %p55, %p56
    %p58 = scmp.ne.s32.totalorder %s47, %s48
    %p59 = scmp.eq.s32.totalorder %s13, 0
    %p60 = por %p58, %p59
    %p61 = scmp.ne.s32.totalorder %s47, %s48
    %p62 = scmp.eq.s32.totalorder %s14, 1
    %p63 = por %p61, %p62
    %p65 = scmp.ne.s32.totalorder %s48, %s64
    %p66 = scmp.eq.s32.totalorder %s14, 0
    %p67 = por %p65, %p66
    %s68 = ssub.s32 %s8, %s15
    %p69 = scmp.eq.s32.totalorder %s68, 0
    %s71 = sadd.s32 %s70, 1
    %s72 = scalar_select %p69, %s70, %s71
    %p75 = pneg %p69
    %p76 = scmp.eq.s32.totalorder %s8, 1
    %p77 = por %p75, %p76
    %p78 = scmp.ne.s32.totalorder %s70, %s73
    %p79 = scmp.eq.s32.totalorder %s8, 0
    %p80 = por %p78, %p79
    %p81 = scmp.ne.s32.totalorder %s70, %s73
    %p82 = scmp.eq.s32.totalorder %s13, 1
    %p83 = por %p81, %p82
    %p84 = scmp.ne.s32.totalorder %s73, %s74
    %p85 = scmp.eq.s32.totalorder %s13, 0
    %p86 = por %p84, %p85
    %p87 = scmp.ne.s32.totalorder %s73, %s74
    %p88 = scmp.eq.s32.totalorder %s14, 1
    %p89 = por %p87, %p88
    %p91 = scmp.ne.s32.totalorder %s74, %s90
    %p92 = scmp.eq.s32.totalorder %s14, 0
    %p93 = por %p91, %p92
    %p94 = scmp.le.s32.totalorder 1, %s8
    %p95 = scmp.lt.s32.totalorder %s8, 3
    %p96 = pnand %p94, %p95
    %p97 = pneg %p96
    // Predicated region
    $region9: #{classifier_forward.15} parent=5 // pred_check
      _
    $region10: #{classifier_forward.15} parent=5 // pred_check_branch
      %99 = sbr.rel (%p96) target = $region12
    $region11: #{classifier_forward.15} parent=5 // pred_region
      %s100 = ssub.s32 %s8, 1
    $region12: #{classifier_forward.15} parent=5 // pred_fallthru
      _
    %p101 = scmp.lt.s32.totalorder %s8, 2
    // Predicated region
    $region13: #{classifier_forward.15} parent=5 // pred_check
      %p102 = pneg %p101
    $region14: #{classifier_forward.15} parent=5 // pred_check_branch
      %104 = sbr.rel (%p102) target = $region16
    $region15: #{classifier_forward.15} parent=5 // pred_region
      // Predicated region
      $region17: #{classifier_forward.15} parent=15 // pred_check
        %p105 = pneg %p28
      $region18: #{classifier_forward.15} parent=15 // pred_check_branch
        %107 = sbr.rel (%p105) target = $region20
      $region19: #{classifier_forward.15} parent=15 // pred_region
        %p108 = scmp.lt.s32.totalorder %s8, 1
        %s109 = scalar_select %p108, %s8, 1
        %s110 = smul.addr %s109, 4
        %s111 = scalar_lea.vmem %s0, %s110
      $region20: #{classifier_forward.15} parent=15 // pred_fallthru
        _
      // Predicated region
      $region21: #{classifier_forward.15} parent=15 // pred_check
        %p112 = pneg %p54
      $region22: #{classifier_forward.15} parent=15 // pred_check_branch
        %114 = sbr.rel (%p112) target = $region24
      $region23: #{classifier_forward.15} parent=15 // pred_region
        %p115 = scmp.lt.s32.totalorder %s8, 1
        %s116 = scalar_select %p115, %s8, 1
        %s117 = scalar_lea.vmem %s1, %s116
      $region24: #{classifier_forward.15} parent=15 // pred_fallthru
        _
    $region16: #{classifier_forward.15} parent=5 // pred_fallthru
      _
    %p118 = scmp.le.s32.totalorder 1, %s8
    %p119 = scmp.lt.s32.totalorder %s8, 3
    %p120 = pnand %p118, %p119
    %p121 = pneg %p120
    // Predicated region
    $region25: #{classifier_forward.15} parent=5 // pred_check
      _
    $region26: #{classifier_forward.15} parent=5 // pred_check_branch
      %123 = sbr.rel (%p120) target = $region28
    $region27: #{classifier_forward.15} parent=5 // pred_region
      %s124 = ssub.s32 %s8, 1
      %p125 = scmp.lt.s32.totalorder %s13, 1
      %s126 = scalar_select %p125, %s13, 1
      %s127 = smul.addr %s126, 4
      %s128 = scalar_lea.vmem %s0, %s127
      %p129 = pneg %p34
      %p130 = pneg %p31
      %p131 = scmp.lt.s32.totalorder %s13, 1
      %s132 = scalar_select %p131, %s13, 1
      %s133 = scalar_lea.vmem %s1, %s132
      %p134 = pneg %p60
      %p135 = pneg %p57
      %p136 = pneg %p86
      %p137 = pneg %p83
      %p138 = scmp.lt.s32.totalorder %s13, 1
      %s139 = scalar_select %p138, %s13, 1
      %s140 = smul.addr %s139, 4
      %s141 = scalar_lea.vmem %s2, %s140
      %p142 = scmp.lt.s32.totalorder %s13, 1
      %s143 = scalar_select %p142, %s13, 1
      %s144 = smul.addr %s143, 4
      %s145 = scalar_lea.vmem %s0, %s144
      %p146 = scmp.lt.s32.totalorder %s13, 1
      %s147 = scalar_select %p146, %s13, 1
      %s148 = scalar_lea.vmem %s1, %s147
      %p149 = scmp.lt.s32.totalorder %s13, 1
      %s150 = scalar_select %p149, %s13, 1
      %s151 = smul.addr %s150, 4
      %s152 = scalar_lea.vmem %s2, %s151
      %v154 = vld [vmem:[%s145] sm:$0xf]
      %v155 = vld [vmem:[%s148] sm:$0x1]
      %v157 = vlaneseq
      %v158 = vshrl.u32 %v157, 7
      %v159 = vsub.s32 0, %v158
      %v160 = vrot.slane %v155, %v159
      %v163 = vunpack.c.l.b16 %v154
      %v164 = vpack.c.b16 %v163, %v163
      %165 = vrot.lane.b32.xlu0 %v164, 96
      %v166 = vpop.permute.xlu0 %165
      %vm167 = vcmask 130048
      %v169 = vsel %vm167, %v154, 0
      %v172 = vsel %vm167, %v166, 0
      %174 = vmatprep.subr.bf16.mxu0 0
      %175 = vmatpush1.bf16.xpose.msra.mxu0 0
      %176 = vmatprep.subr.bf16.mxu0 0
      %177 = vmatpush1.bf16.xpose.msra.mxu0 0
      %178 = vmatprep.subr.bf16.mxu0 0
      %179 = vmatpush1.bf16.xpose.msra.mxu0 0
      %180 = vmatprep.subr.bf16.mxu0 0
      %181 = vmatpush1.bf16.xpose.msra.mxu0 0
      %182 = vmatprep.subr.bf16.mxu0 0
      %183 = vmatpush1.bf16.xpose.msra.mxu0 0
      %184 = vmatprep.subr.bf16.mxu0 0
      %185 = vmatpush1.bf16.xpose.msra.mxu0 0
      %186 = vmatprep.subr.bf16.mxu0 0
      %187 = vmatpush1.bf16.xpose.msra.mxu0 0
      %188 = vmatprep.subr.bf16.mxu0 0
      %189 = vmatpush1.bf16.xpose.msra.mxu0 %v172
      %190 = vmatprep.subr.bf16.mxu0 0
      %191 = vmatpush2.bf16.xpose.msra.mxu0 0
      %192 = vmatprep.subr.bf16.mxu0 0
      %193 = vmatpush2.bf16.xpose.msra.mxu0 0
      %194 = vmatprep.subr.bf16.mxu0 0
      %195 = vmatpush2.bf16.xpose.msra.mxu0 0
      %196 = vmatprep.subr.bf16.mxu0 0
      %197 = vmatpush2.bf16.xpose.msra.mxu0 0
      %198 = vmatprep.subr.bf16.mxu0 0
      %199 = vmatpush2.bf16.xpose.msra.mxu0 0
      %200 = vmatprep.subr.bf16.mxu0 0
      %201 = vmatpush2.bf16.xpose.msra.mxu0 0
      %202 = vmatprep.subr.bf16.mxu0 0
      %203 = vmatpush2.bf16.xpose.msra.mxu0 0
      %204 = vmatprep.subr.bf16.mxu0 0
      %205 = vmatpush2.bf16.xpose.msra.mxu0 0
      %206 = vmatprep.mubr.bf16.mxu0 0
      %207 = vmatmul.mubr.bf16.gmra.mxu0 %v169
      %v208 = vpop.f32.mrf.mxu0
      %v209 = vadd.f32 %v160, %v208
      %v210 = vpop.f32.mrf.mxu0
      %v211 = vpop.f32.mrf.mxu0
      %v212 = vpop.f32.mrf.mxu0
      %213 = vdwg.mxu0
      %vm214 = vcmask 64512
      %v215 = vsel %vm214, %v209, -inf
      %216 = vmax.xlane.f32.xlu0 %v215
      %v217 = vpop.xlane.xlu0 %216
      %v218 = vsub.f32 %v209, %v217
      %v219 = vmul.f32 %v218, 1.442695
      %v220 = vpow.pop %v219
      %v221 = vsel %vm214, %v220, 0.0
      %222 = vadd.xlane.f32.xlu0 %v221
      %v223 = vpop.xlane.xlu0 %222
      %v224 = vpack.c.bf16 %v220, %v220
      %225 = vrot.lane.b32.xlu0 %v164, 64
      %v226 = vpop.permute.xlu0 %225
      %v228 = vsel %vm214, %v224, 0
      %vm230 = vcmask 1043456
      %v232 = vsel %vm230, %v226, 0
      %234 = vmatprep.subr.bf16.mxu0 0
      %235 = vmatpush1.bf16.msra.mxu0 0
      %236 = vmatprep.subr.bf16.mxu0 0
      %237 = vmatpush1.bf16.msra.mxu0 0
      %238 = vmatprep.subr.bf16.mxu0 0
      %239 = vmatpush1.bf16.msra.mxu0 0
      %240 = vmatprep.subr.bf16.mxu0 0
      %241 = vmatpush1.bf16.msra.mxu0 0
      %242 = vmatprep.subr.bf16.mxu0 0
      %243 = vmatpush1.bf16.msra.mxu0 0
      %244 = vmatprep.subr.bf16.mxu0 0
      %245 = vmatpush1.bf16.msra.mxu0 0
      %246 = vmatprep.subr.bf16.mxu0 0
      %247 = vmatpush1.bf16.msra.mxu0 0
      %248 = vmatprep.subr.bf16.mxu0 0
      %249 = vmatpush1.bf16.msra.mxu0 %v232
      %250 = vmatprep.subr.bf16.mxu0 0
      %251 = vmatpush2.bf16.msra.mxu0 0
      %252 = vmatprep.subr.bf16.mxu0 0
      %253 = vmatpush2.bf16.msra.mxu0 0
      %254 = vmatprep.subr.bf16.mxu0 0
      %255 = vmatpush2.bf16.msra.mxu0 0
      %256 = vmatprep.subr.bf16.mxu0 0
      %257 = vmatpush2.bf16.msra.mxu0 0
      %258 = vmatprep.subr.bf16.mxu0 0
      %259 = vmatpush2.bf16.msra.mxu0 0
      %260 = vmatprep.subr.bf16.mxu0 0
      %261 = vmatpush2.bf16.msra.mxu0 0
      %262 = vmatprep.subr.bf16.mxu0 0
      %263 = vmatpush2.bf16.msra.mxu0 0
      %264 = vmatprep.subr.bf16.mxu0 0
      %265 = vmatpush2.bf16.msra.mxu0 0
      %266 = vmatprep.mubr.bf16.mxu0 0
      %267 = vmatmul.mubr.bf16.gmra.mxu0 %v228
      %v268 = vpop.f32.mrf.mxu0
      %v269 = vadd.f32 0.0, %v268
      %v270 = vpop.f32.mrf.mxu0
      %v271 = vpop.f32.mrf.mxu0
      %v272 = vpop.f32.mrf.mxu0
      %273 = vdwg.mxu0
      %v274 = vrcp.pop %v223
      %v275 = vmul.f32 %v269, %v274
      %276 = vrot.lane.b32.xlu0 %v164, 112
      %v277 = vpop.permute.xlu0 %276
      %278 = vrot.lane.b32.xlu0 %v164, 80
      %v279 = vpop.permute.xlu0 %278
      %v281 = vsel %vm167, %v277, 0
      %v284 = vsel %vm167, %v279, 0
      %286 = vmatprep.subr.bf16.mxu0 0
      %287 = vmatpush1.bf16.xpose.msra.mxu0 0
      %288 = vmatprep.subr.bf16.mxu0 0
      %289 = vmatpush1.bf16.xpose.msra.mxu0 0
      %290 = vmatprep.subr.bf16.mxu0 0
      %291 = vmatpush1.bf16.xpose.msra.mxu0 0
      %292 = vmatprep.subr.bf16.mxu0 0
      %293 = vmatpush1.bf16.xpose.msra.mxu0 0
      %294 = vmatprep.subr.bf16.mxu0 0
      %295 = vmatpush1.bf16.xpose.msra.mxu0 0
      %296 = vmatprep.subr.bf16.mxu0 0
      %297 = vmatpush1.bf16.xpose.msra.mxu0 0
      %298 = vmatprep.subr.bf16.mxu0 0
      %299 = vmatpush1.bf16.xpose.msra.mxu0 0
      %300 = vmatprep.subr.bf16.mxu0 0
      %301 = vmatpush1.bf16.xpose.msra.mxu0 %v284
      %302 = vmatprep.subr.bf16.mxu0 0
      %303 = vmatpush2.bf16.xpose.msra.mxu0 0
      %304 = vmatprep.subr.bf16.mxu0 0
      %305 = vmatpush2.bf16.xpose.msra.mxu0 0
      %306 = vmatprep.subr.bf16.mxu0 0
      %307 = vmatpush2.bf16.xpose.msra.mxu0 0
      %308 = vmatprep.subr.bf16.mxu0 0
      %309 = vmatpush2.bf16.xpose.msra.mxu0 0
      %310 = vmatprep.subr.bf16.mxu0 0
      %311 = vmatpush2.bf16.xpose.msra.mxu0 0
      %312 = vmatprep.subr.bf16.mxu0 0
      %313 = vmatpush2.bf16.xpose.msra.mxu0 0
      %314 = vmatprep.subr.bf16.mxu0 0
      %315 = vmatpush2.bf16.xpose.msra.mxu0 0
      %316 = vmatprep.subr.bf16.mxu0 0
      %317 = vmatpush2.bf16.xpose.msra.mxu0 0
      %318 = vmatprep.mubr.bf16.mxu0 0
      %319 = vmatmul.mubr.bf16.gmra.mxu0 %v281
      %v320 = vpop.f32.mrf.mxu0
      %v321 = vadd.f32 %v160, %v320
      %v322 = vpop.f32.mrf.mxu0
      %v323 = vpop.f32.mrf.mxu0
      %v324 = vpop.f32.mrf.mxu0
      %325 = vdwg.mxu0
      %v326 = vsel %vm214, %v321, -inf
      %327 = vmax.xlane.f32.xlu0 %v326
      %v328 = vpop.xlane.xlu0 %327
      %v329 = vsub.f32 %v321, %v328
      %v330 = vmul.f32 %v329, 1.442695
      %v331 = vpow.pop %v330
      %v332 = vsel %vm214, %v331, 0.0
      %333 = vadd.xlane.f32.xlu0 %v332
      %v334 = vpop.xlane.xlu0 %333
      %v335 = vpack.c.bf16 %v331, %v331
      %336 = vrot.lane.b32.xlu0 %v164, 48
      %v337 = vpop.permute.xlu0 %336
      %v339 = vsel %vm214, %v335, 0
      %v342 = vsel %vm230, %v337, 0
      %344 = vmatprep.subr.bf16.mxu0 0
      %345 = vmatpush1.bf16.msra.mxu0 0
      %346 = vmatprep.subr.bf16.mxu0 0
      %347 = vmatpush1.bf16.msra.mxu0 0
      %348 = vmatprep.subr.bf16.mxu0 0
      %349 = vmatpush1.bf16.msra.mxu0 0
      %350 = vmatprep.subr.bf16.mxu0 0
      %351 = vmatpush1.bf16.msra.mxu0 0
      %352 = vmatprep.subr.bf16.mxu0 0
      %353 = vmatpush1.bf16.msra.mxu0 0
      %354 = vmatprep.subr.bf16.mxu0 0
      %355 = vmatpush1.bf16.msra.mxu0 0
      %356 = vmatprep.subr.bf16.mxu0 0
      %357 = vmatpush1.bf16.msra.mxu0 0
      %358 = vmatprep.subr.bf16.mxu0 0
      %359 = vmatpush1.bf16.msra.mxu0 %v342
      %360 = vmatprep.subr.bf16.mxu0 0
      %361 = vmatpush2.bf16.msra.mxu0 0
      %362 = vmatprep.subr.bf16.mxu0 0
      %363 = vmatpush2.bf16.msra.mxu0 0
      %364 = vmatprep.subr.bf16.mxu0 0
      %365 = vmatpush2.bf16.msra.mxu0 0
      %366 = vmatprep.subr.bf16.mxu0 0
      %367 = vmatpush2.bf16.msra.mxu0 0
      %368 = vmatprep.subr.bf16.mxu0 0
      %369 = vmatpush2.bf16.msra.mxu0 0
      %370 = vmatprep.subr.bf16.mxu0 0
      %371 = vmatpush2.bf16.msra.mxu0 0
      %372 = vmatprep.subr.bf16.mxu0 0
      %373 = vmatpush2.bf16.msra.mxu0 0
      %374 = vmatprep.subr.bf16.mxu0 0
      %375 = vmatpush2.bf16.msra.mxu0 0
      %376 = vmatprep.mubr.bf16.mxu0 0
      %377 = vmatmul.mubr.bf16.gmra.mxu0 %v339
      %v378 = vpop.f32.mrf.mxu0
      %v379 = vadd.f32 0.0, %v378
      %v380 = vpop.f32.mrf.mxu0
      %v381 = vpop.f32.mrf.mxu0
      %v382 = vpop.f32.mrf.mxu0
      %383 = vdwg.mxu0
      %v384 = vrcp.pop %v334
      %v385 = vmul.f32 %v379, %v384
      %387 = vrot.lane.b32.xlu0 %v385, 16
      %v388 = vpop.permute.xlu0 %387
      %v390 = vsel %vm167, %v275, %v388
      %vm391 = vcmask 261120
      %v392 = vsel %vm391, %v390, 0.0
      %v393 = vpack.c.bf16 %v392, %v392
      %394 = vst [vmem:[%s152] sm:$0xf] %v393
      %p395 = scmp.lt.s32.totalorder %s13, 1
      %s396 = scalar_select %p395, %s13, 1
      %s397 = smul.addr %s396, 4
      %s398 = scalar_lea.vmem %s2, %s397
      // Predicated region
      $region29: #{classifier_forward.15} parent=27 // pred_check
        %p399 = pneg %p83
      $region30: #{classifier_forward.15} parent=27 // pred_check_branch
        %401 = sbr.rel (%p399) target = $region32
      $region31: #{classifier_forward.15} parent=27 // pred_region
        _
      $region32: #{classifier_forward.15} parent=27 // pred_fallthru
        _
    $region28: #{classifier_forward.15} parent=5 // pred_fallthru
      _
    %p402 = scmp.le.s32.totalorder 2, %s8
    // Predicated region
    $region33: #{classifier_forward.15} parent=5 // pred_check
      %p403 = pneg %p402
    $region34: #{classifier_forward.15} parent=5 // pred_check_branch
      %405 = sbr.rel (%p403) target = $region36
    $region35: #{classifier_forward.15} parent=5 // pred_region
      %s406 = ssub.s32 %s8, 2
      // Predicated region
      $region37: #{classifier_forward.15} parent=35 // pred_check
        %p407 = pneg %p89
      $region38: #{classifier_forward.15} parent=35 // pred_check_branch
        %409 = sbr.rel (%p407) target = $region40
      $region39: #{classifier_forward.15} parent=35 // pred_region
        %p410 = scmp.lt.s32.totalorder %s14, 1
        %s411 = scalar_select %p410, %s14, 1
        %s412 = smul.addr %s411, 4
        %s413 = scalar_lea.vmem %s2, %s412
      $region40: #{classifier_forward.15} parent=35 // pred_fallthru
        _
    $region36: #{classifier_forward.15} parent=5 // pred_fallthru
      _
  $region6: #{classifier_forward.15} parent=0 // loop_footer
    %s12 = sadd.s32 1, %s8
  $region7: #{classifier_forward.15} parent=0 // loop_footer_branch
    %7 = sbr.rel target = $region3
  $region8: #{classifier_forward.15} parent=0 // loop_exit
    _

// kernel: classifier_forward.17
$region0: #{classifier_forward.17}
  #allocation0 [shape = 'u32[]', space=smem, size = 0x4, offset = 0x4, fixed_abs, tag = 'smem constant byte address 0x4 - core index']
  #allocation1 [shape = 'u32[144,128]{1,0:T(1,128)}', space=vmem, size = 0x12000, scoped, tag = 'internal scratch']
  #allocation2 [shape = 'f32[16,128]{1,0:T(8,128)}', space=vmem, size = 0x2000, scoped, tag = 'scratch operand']
  %s0 = inlined_call_operand.vmem [shape: bf16[16,128], index: 0, kind: input, shape index: {}]
  %s1 = inlined_call_operand.vmem [shape: bf16[128,128], index: 1, kind: input, shape index: {}]
  %s2 = inlined_call_operand.vmem [shape: f32[1,128], index: 2, kind: input, shape index: {}]
  %s3 = inlined_call_operand.vmem [shape: bf16[16,128], index: 3, kind: output, shape index: {}]
  %s4 = sld [smem:[#allocation0]]
  $region30: #{classifier_forward.17} parent=0
    _
  %s6 = ssub.s32 1, %s4
  %s7 = scalar_select 0, %s6, %s4
  // Predicated region
  $region2: #{classifier_forward.17} parent=0 // pred_check
    _
  $region3: #{classifier_forward.17} parent=0 // pred_check_branch
    %9 = sbr.rel (0) target = $region5
  $region4: #{classifier_forward.17} parent=0 // pred_region
    _
  $region5: #{classifier_forward.17} parent=0 // pred_fallthru
    _
  // Predicated region
  $region6: #{classifier_forward.17} parent=0 // pred_check
    _
  $region7: #{classifier_forward.17} parent=0 // pred_check_branch
    %11 = sbr.rel (0) target = $region9
  $region8: #{classifier_forward.17} parent=0 // pred_region
    _
  $region9: #{classifier_forward.17} parent=0 // pred_fallthru
    _
  // Predicated region
  $region10: #{classifier_forward.17} parent=0 // pred_check
    _
  $region11: #{classifier_forward.17} parent=0 // pred_check_branch
    %13 = sbr.rel (0) target = $region13
  $region12: #{classifier_forward.17} parent=0 // pred_region
    _
  $region13: #{classifier_forward.17} parent=0 // pred_fallthru
    _
  %p15 = scmp.eq.s32.totalorder 0, 0
  // Predicated region
  $region14: #{classifier_forward.17} parent=0 // pred_check
    %p16 = pneg %p15
  $region15: #{classifier_forward.17} parent=0 // pred_check_branch
    %18 = sbr.rel (%p16) target = $region17
  $region16: #{classifier_forward.17} parent=0 // pred_region
    %19 = vst [vmem:[#allocation2] sm:$0xff] 0.0
    %20 = vst [vmem:[#allocation2 + $0x8] sm:$0xff] 0.0
  $region17: #{classifier_forward.17} parent=0 // pred_fallthru
    _
  %v21 = vld [vmem:[#allocation2] sm:$0xff]
  %v22 = vld [vmem:[#allocation2 + $0x8] sm:$0xff]
  %v23 = vld [vmem:[%s0] sm:$0xf]
  %v24 = vld [vmem:[%s0 + $0x4] sm:$0xf]
  %v25 = vld [vmem:[%s1] sm:$0xf]
  %v26 = vld [vmem:[%s1 + $0x4] sm:$0xf]
  %v27 = vld [vmem:[%s1 + $0x8] sm:$0xf]
  %v28 = vld [vmem:[%s1 + $0xc] sm:$0xf]
  %v29 = vld [vmem:[%s1 + $0x10] sm:$0xf]
  %v30 = vld [vmem:[%s1 + $0x14] sm:$0xf]
  %v31 = vld [vmem:[%s1 + $0x18] sm:$0xf]
  %v32 = vld [vmem:[%s1 + $0x1c] sm:$0xf]
  %v33 = vld [vmem:[%s1 + $0x20] sm:$0xf]
  %v34 = vld [vmem:[%s1 + $0x24] sm:$0xf]
  %v35 = vld [vmem:[%s1 + $0x28] sm:$0xf]
  %v36 = vld [vmem:[%s1 + $0x2c] sm:$0xf]
  %v37 = vld [vmem:[%s1 + $0x30] sm:$0xf]
  %v38 = vld [vmem:[%s1 + $0x34] sm:$0xf]
  %v39 = vld [vmem:[%s1 + $0x38] sm:$0xf]
  %v40 = vld [vmem:[%s1 + $0x3c] sm:$0xf]
  %v43 = vunpack.c.l.b16 %v23
  %v44 = vunpack.c.l.b16 %v24
  %v45 = vpack.c.b16 %v44, %v43
  %v63 = vunpack.c.l.b16 %v25
  %v64 = vunpack.c.l.b16 %v26
  %v65 = vunpack.c.l.b16 %v27
  %v66 = vunpack.c.l.b16 %v28
  %v67 = vunpack.c.l.b16 %v29
  %v68 = vunpack.c.l.b16 %v30
  %v69 = vunpack.c.l.b16 %v31
  %v70 = vunpack.c.l.b16 %v32
  %v71 = vunpack.c.l.b16 %v33
  %v72 = vunpack.c.l.b16 %v34
  %v73 = vunpack.c.l.b16 %v35
  %v74 = vunpack.c.l.b16 %v36
  %v75 = vunpack.c.l.b16 %v37
  %v76 = vunpack.c.l.b16 %v38
  %v77 = vunpack.c.l.b16 %v39
  %v78 = vunpack.c.l.b16 %v40
  %v79 = vpack.c.b16 %v64, %v63
  %v80 = vpack.c.b16 %v66, %v65
  %v81 = vpack.c.b16 %v68, %v67
  %v82 = vpack.c.b16 %v70, %v69
  %v83 = vpack.c.b16 %v72, %v71
  %v84 = vpack.c.b16 %v74, %v73
  %v85 = vpack.c.b16 %v76, %v75
  %v86 = vpack.c.b16 %v78, %v77
  %95 = vmatprep.subr.bf16.mxu0 0
  %96 = vmatpush1.bf16.msra.mxu0 %v86
  %97 = vmatprep.subr.bf16.mxu0 0
  %98 = vmatpush1.bf16.msra.mxu0 %v85
  %99 = vmatprep.subr.bf16.mxu0 0
  %100 = vmatpush1.bf16.msra.mxu0 %v84
  %101 = vmatprep.subr.bf16.mxu0 0
  %102 = vmatpush1.bf16.msra.mxu0 %v83
  %103 = vmatprep.subr.bf16.mxu0 0
  %104 = vmatpush1.bf16.msra.mxu0 %v82
  %105 = vmatprep.subr.bf16.mxu0 0
  %106 = vmatpush1.bf16.msra.mxu0 %v81
  %107 = vmatprep.subr.bf16.mxu0 0
  %108 = vmatpush1.bf16.msra.mxu0 %v80
  %109 = vmatprep.subr.bf16.mxu0 0
  %110 = vmatpush1.bf16.msra.mxu0 %v79
  %111 = vmatprep.subr.bf16.mxu0 0
  %112 = vmatpush2.bf16.msra.mxu0 0
  %113 = vmatprep.subr.bf16.mxu0 0
  %114 = vmatpush2.bf16.msra.mxu0 0
  %115 = vmatprep.subr.bf16.mxu0 0
  %116 = vmatpush2.bf16.msra.mxu0 0
  %117 = vmatprep.subr.bf16.mxu0 0
  %118 = vmatpush2.bf16.msra.mxu0 0
  %119 = vmatprep.subr.bf16.mxu0 0
  %120 = vmatpush2.bf16.msra.mxu0 0
  %121 = vmatprep.subr.bf16.mxu0 0
  %122 = vmatpush2.bf16.msra.mxu0 0
  %123 = vmatprep.subr.bf16.mxu0 0
  %124 = vmatpush2.bf16.msra.mxu0 0
  %125 = vmatprep.subr.bf16.mxu0 0
  %126 = vmatpush2.bf16.msra.mxu0 0
  %127 = vmatprep.mubr.bf16.mxu0 0
  %128 = vmatmul.mubr.bf16.gmra.mxu0 %v45
  %v129 = vpop.f32.mrf.mxu0
  %v130 = vadd.f32 0.0, %v129
  %v131 = vpop.f32.mrf.mxu0
  %v132 = vpop.f32.mrf.mxu0
  %v133 = vadd.f32 0.0, %v132
  %v134 = vpop.f32.mrf.mxu0
  %135 = vdwg.mxu0
  %v136 = vadd.f32 %v21, %v130
  %v137 = vadd.f32 %v22, %v133
  %138 = vst [vmem:[#allocation2] sm:$0xff] %v136
  %139 = vst [vmem:[#allocation2 + $0x8] sm:$0xff] %v137
  // Predicated region
  $region18: #{classifier_forward.17} parent=0 // pred_check
    %p140 = pneg %p15
  $region19: #{classifier_forward.17} parent=0 // pred_check_branch
    %142 = sbr.rel (%p140) target = $region21
  $region20: #{classifier_forward.17} parent=0 // pred_region
    %v143 = vld [vmem:[#allocation2] sm:$0xff]
    %v144 = vld [vmem:[#allocation2 + $0x8] sm:$0xff]
    %v145 = vld [vmem:[%s2] sm:$0x1]
    %v147 = vlaneseq
    %v148 = vshrl.u32 %v147, 7
    %v149 = vsub.s32 0, %v148
    %v150 = vrot.slane %v145, %v149
    %v152 = vadd.f32 %v143, %v150
    %v153 = vadd.f32 %v144, %v150
    %v154 = vmul.f32 %v152, 0.5
    %v155 = vmul.f32 %v153, 0.5
    %v156 = vmul.f32 %v152, 0.044715
    %v157 = vmul.f32 %v153, 0.044715
    %v158 = vmul.f32 %v156, %v152
    %v159 = vmul.f32 %v157, %v153
    %v160 = vmul.f32 %v158, %v152
    %v161 = vmul.f32 %v159, %v153
    %v162 = vadd.f32 %v152, %v160
    %v163 = vadd.f32 %v153, %v161
    %v164 = vmul.f32 %v162, 0.7978846
    %v165 = vmul.f32 %v163, 0.7978846
    %v166 = vtanh.pop %v164
    %v167 = vtanh.pop %v165
    %v168 = vadd.f32 %v166, 1.0
    %v169 = vadd.f32 %v167, 1.0
    %v170 = vmul.f32 %v154, %v168
    %v171 = vmul.f32 %v155, %v169
    %v172 = vpack.c.bf16 %v171, %v170
    %v174 = vunpack.c.l.b16 %v172
    %v175 = vunpack.c.h.b16 %v172
    %v176 = vpack.c.b16 %v174, %v174
    %v177 = vpack.c.b16 %v175, %v175
    %180 = vst [vmem:[%s3] sm:$0xf] %v176
    %181 = vst [vmem:[%s3 + $0x4] sm:$0xf] %v177
  $region21: #{classifier_forward.17} parent=0 // pred_fallthru
    _
  // Predicated region
  $region22: #{classifier_forward.17} parent=0 // pred_check
    _
  $region23: #{classifier_forward.17} parent=0 // pred_check_branch
    %183 = sbr.rel (0) target = $region25
  $region24: #{classifier_forward.17} parent=0 // pred_region
    _
  $region25: #{classifier_forward.17} parent=0 // pred_fallthru
    _
  // Predicated region
  $region26: #{classifier_forward.17} parent=0 // pred_check
    _
  $region27: #{classifier_forward.17} parent=0 // pred_check_branch
    %185 = sbr.rel (0) target = $region29
  $region28: #{classifier_forward.17} parent=0 // pred_region
    _
  $region29: #{classifier_forward.17} parent=0 // pred_fallthru
    _

// kernel: classifier_forward.24
$region0: #{classifier_forward.24}
  #allocation0 [shape = 'u32[]', space=smem, size = 0x4, offset = 0x4, fixed_abs, tag = 'smem constant byte address 0x4 - core index']
  #allocation1 [shape = 'u32[144,128]{1,0:T(1,128)}', space=vmem, size = 0x12000, scoped, tag = 'internal scratch']
  #allocation2 [shape = 'f32[8,128]{1,0:T(8,128)}', space=vmem, size = 0x1000, scoped, tag = 'scratch operand']
  %s0 = inlined_call_operand.vmem [shape: bf16[8,128], index: 0, kind: input, shape index: {}]
  %s1 = inlined_call_operand.vmem [shape: bf16[128,128], index: 1, kind: input, shape index: {}]
  %s2 = inlined_call_operand.vmem [shape: f32[1,128], index: 2, kind: input, shape index: {}]
  %s3 = inlined_call_operand.vmem [shape: bf16[8,128], index: 3, kind: output, shape index: {}]
  %s4 = sld [smem:[#allocation0]]
  $region30: #{classifier_forward.24} parent=0
    _
  %s6 = ssub.s32 1, %s4
  %s7 = scalar_select 0, %s6, %s4
  // Predicated region
  $region2: #{classifier_forward.24} parent=0 // pred_check
    _
  $region3: #{classifier_forward.24} parent=0 // pred_check_branch
    %9 = sbr.rel (0) target = $region5
  $region4: #{classifier_forward.24} parent=0 // pred_region
    _
  $region5: #{classifier_forward.24} parent=0 // pred_fallthru
    _
  // Predicated region
  $region6: #{classifier_forward.24} parent=0 // pred_check
    _
  $region7: #{classifier_forward.24} parent=0 // pred_check_branch
    %11 = sbr.rel (0) target = $region9
  $region8: #{classifier_forward.24} parent=0 // pred_region
    _
  $region9: #{classifier_forward.24} parent=0 // pred_fallthru
    _
  // Predicated region
  $region10: #{classifier_forward.24} parent=0 // pred_check
    _
  $region11: #{classifier_forward.24} parent=0 // pred_check_branch
    %13 = sbr.rel (0) target = $region13
  $region12: #{classifier_forward.24} parent=0 // pred_region
    _
  $region13: #{classifier_forward.24} parent=0 // pred_fallthru
    _
  %p15 = scmp.eq.s32.totalorder 0, 0
  // Predicated region
  $region14: #{classifier_forward.24} parent=0 // pred_check
    %p16 = pneg %p15
  $region15: #{classifier_forward.24} parent=0 // pred_check_branch
    %18 = sbr.rel (%p16) target = $region17
  $region16: #{classifier_forward.24} parent=0 // pred_region
    %19 = vst [vmem:[#allocation2] sm:$0xff] 0.0
  $region17: #{classifier_forward.24} parent=0 // pred_fallthru
    _
  %v20 = vld [vmem:[#allocation2] sm:$0xff]
  %v21 = vld [vmem:[%s0] sm:$0xf]
  %v22 = vld [vmem:[%s1] sm:$0xf]
  %v23 = vld [vmem:[%s1 + $0x4] sm:$0xf]
  %v24 = vld [vmem:[%s1 + $0x8] sm:$0xf]
  %v25 = vld [vmem:[%s1 + $0xc] sm:$0xf]
  %v26 = vld [vmem:[%s1 + $0x10] sm:$0xf]
  %v27 = vld [vmem:[%s1 + $0x14] sm:$0xf]
  %v28 = vld [vmem:[%s1 + $0x18] sm:$0xf]
  %v29 = vld [vmem:[%s1 + $0x1c] sm:$0xf]
  %v30 = vld [vmem:[%s1 + $0x20] sm:$0xf]
  %v31 = vld [vmem:[%s1 + $0x24] sm:$0xf]
  %v32 = vld [vmem:[%s1 + $0x28] sm:$0xf]
  %v33 = vld [vmem:[%s1 + $0x2c] sm:$0xf]
  %v34 = vld [vmem:[%s1 + $0x30] sm:$0xf]
  %v35 = vld [vmem:[%s1 + $0x34] sm:$0xf]
  %v36 = vld [vmem:[%s1 + $0x38] sm:$0xf]
  %v37 = vld [vmem:[%s1 + $0x3c] sm:$0xf]
  %v54 = vunpack.c.l.b16 %v22
  %v55 = vunpack.c.l.b16 %v23
  %v56 = vunpack.c.l.b16 %v24
  %v57 = vunpack.c.l.b16 %v25
  %v58 = vunpack.c.l.b16 %v26
  %v59 = vunpack.c.l.b16 %v27
  %v60 = vunpack.c.l.b16 %v28
  %v61 = vunpack.c.l.b16 %v29
  %v62 = vunpack.c.l.b16 %v30
  %v63 = vunpack.c.l.b16 %v31
  %v64 = vunpack.c.l.b16 %v32
  %v65 = vunpack.c.l.b16 %v33
  %v66 = vunpack.c.l.b16 %v34
  %v67 = vunpack.c.l.b16 %v35
  %v68 = vunpack.c.l.b16 %v36
  %v69 = vunpack.c.l.b16 %v37
  %v70 = vpack.c.b16 %v55, %v54
  %v71 = vpack.c.b16 %v57, %v56
  %v72 = vpack.c.b16 %v59, %v58
  %v73 = vpack.c.b16 %v61, %v60
  %v74 = vpack.c.b16 %v63, %v62
  %v75 = vpack.c.b16 %v65, %v64
  %v76 = vpack.c.b16 %v67, %v66
  %v77 = vpack.c.b16 %v69, %v68
  %86 = vmatprep.subr.bf16.mxu0 0
  %87 = vmatpush1.bf16.msra.mxu0 %v77
  %88 = vmatprep.subr.bf16.mxu0 0
  %89 = vmatpush1.bf16.msra.mxu0 %v76
  %90 = vmatprep.subr.bf16.mxu0 0
  %91 = vmatpush1.bf16.msra.mxu0 %v75
  %92 = vmatprep.subr.bf16.mxu0 0
  %93 = vmatpush1.bf16.msra.mxu0 %v74
  %94 = vmatprep.subr.bf16.mxu0 0
  %95 = vmatpush1.bf16.msra.mxu0 %v73
  %96 = vmatprep.subr.bf16.mxu0 0
  %97 = vmatpush1.bf16.msra.mxu0 %v72
  %98 = vmatprep.subr.bf16.mxu0 0
  %99 = vmatpush1.bf16.msra.mxu0 %v71
  %100 = vmatprep.subr.bf16.mxu0 0
  %101 = vmatpush1.bf16.msra.mxu0 %v70
  %102 = vmatprep.subr.bf16.mxu0 0
  %103 = vmatpush2.bf16.msra.mxu0 0
  %104 = vmatprep.subr.bf16.mxu0 0
  %105 = vmatpush2.bf16.msra.mxu0 0
  %106 = vmatprep.subr.bf16.mxu0 0
  %107 = vmatpush2.bf16.msra.mxu0 0
  %108 = vmatprep.subr.bf16.mxu0 0
  %109 = vmatpush2.bf16.msra.mxu0 0
  %110 = vmatprep.subr.bf16.mxu0 0
  %111 = vmatpush2.bf16.msra.mxu0 0
  %112 = vmatprep.subr.bf16.mxu0 0
  %113 = vmatpush2.bf16.msra.mxu0 0
  %114 = vmatprep.subr.bf16.mxu0 0
  %115 = vmatpush2.bf16.msra.mxu0 0
  %116 = vmatprep.subr.bf16.mxu0 0
  %117 = vmatpush2.bf16.msra.mxu0 0
  %118 = vmatprep.mubr.bf16.mxu0 0
  %119 = vmatmul.mubr.bf16.gmra.mxu0 %v21
  %v120 = vpop.f32.mrf.mxu0
  %v121 = vadd.f32 0.0, %v120
  %v122 = vpop.f32.mrf.mxu0
  %v123 = vpop.f32.mrf.mxu0
  %v124 = vpop.f32.mrf.mxu0
  %125 = vdwg.mxu0
  %v126 = vadd.f32 %v20, %v121
  %127 = vst [vmem:[#allocation2] sm:$0xff] %v126
  // Predicated region
  $region18: #{classifier_forward.24} parent=0 // pred_check
    %p128 = pneg %p15
  $region19: #{classifier_forward.24} parent=0 // pred_check_branch
    %130 = sbr.rel (%p128) target = $region21
  $region20: #{classifier_forward.24} parent=0 // pred_region
    %v131 = vld [vmem:[#allocation2] sm:$0xff]
    %v132 = vld [vmem:[%s2] sm:$0x1]
    %v134 = vlaneseq
    %v135 = vshrl.u32 %v134, 7
    %v136 = vsub.s32 0, %v135
    %v137 = vrot.slane %v132, %v136
    %v139 = vadd.f32 %v131, %v137
    %v140 = vtanh.pop %v139
    %v141 = vpack.c.bf16 %v140, %v140
    %142 = vst [vmem:[%s3] sm:$0xf] %v141
  $region21: #{classifier_forward.24} parent=0 // pred_fallthru
    _
  // Predicated region
  $region22: #{classifier_forward.24} parent=0 // pred_check
    _
  $region23: #{classifier_forward.24} parent=0 // pred_check_branch
    %144 = sbr.rel (0) target = $region25
  $region24: #{classifier_forward.24} parent=0 // pred_region
    _
  $region25: #{classifier_forward.24} parent=0 // pred_fallthru
    _
  // Predicated region
  $region26: #{classifier_forward.24} parent=0 // pred_check
    _
  $region27: #{classifier_forward.24} parent=0 // pred_check_branch
    %146 = sbr.rel (0) target = $region29
  $region28: #{classifier_forward.24} parent=0 // pred_region
    _
  $region29: #{classifier_forward.24} parent=0 // pred_fallthru
    _

// kernel: classifier_forward.25
$region0: #{classifier_forward.25}
  #allocation0 [shape = 'u32[]', space=smem, size = 0x4, offset = 0x4, fixed_abs, tag = 'smem constant byte address 0x4 - core index']
  #allocation1 [shape = 'u32[144,128]{1,0:T(1,128)}', space=vmem, size = 0x12000, scoped, tag = 'internal scratch']
  #allocation2 [shape = 'f32[8,128]{1,0:T(8,128)}', space=vmem, size = 0x1000, scoped, tag = 'scratch operand']
  %s0 = inlined_call_operand.vmem [shape: bf16[8,128], index: 0, kind: input, shape index: {}]
  %s1 = inlined_call_operand.vmem [shape: bf16[128,128], index: 1, kind: input, shape index: {}]
  %s2 = inlined_call_operand.vmem [shape: f32[1,128], index: 2, kind: input, shape index: {}]
  %s3 = inlined_call_operand.vmem [shape: f32[8,128], index: 3, kind: output, shape index: {}]
  %s4 = sld [smem:[#allocation0]]
  $region30: #{classifier_forward.25} parent=0
    _
  %s6 = ssub.s32 1, %s4
  %s7 = scalar_select 0, %s6, %s4
  // Predicated region
  $region2: #{classifier_forward.25} parent=0 // pred_check
    _
  $region3: #{classifier_forward.25} parent=0 // pred_check_branch
    %9 = sbr.rel (0) target = $region5
  $region4: #{classifier_forward.25} parent=0 // pred_region
    _
  $region5: #{classifier_forward.25} parent=0 // pred_fallthru
    _
  // Predicated region
  $region6: #{classifier_forward.25} parent=0 // pred_check
    _
  $region7: #{classifier_forward.25} parent=0 // pred_check_branch
    %11 = sbr.rel (0) target = $region9
  $region8: #{classifier_forward.25} parent=0 // pred_region
    _
  $region9: #{classifier_forward.25} parent=0 // pred_fallthru
    _
  // Predicated region
  $region10: #{classifier_forward.25} parent=0 // pred_check
    _
  $region11: #{classifier_forward.25} parent=0 // pred_check_branch
    %13 = sbr.rel (0) target = $region13
  $region12: #{classifier_forward.25} parent=0 // pred_region
    _
  $region13: #{classifier_forward.25} parent=0 // pred_fallthru
    _
  %p15 = scmp.eq.s32.totalorder 0, 0
  // Predicated region
  $region14: #{classifier_forward.25} parent=0 // pred_check
    %p16 = pneg %p15
  $region15: #{classifier_forward.25} parent=0 // pred_check_branch
    %18 = sbr.rel (%p16) target = $region17
  $region16: #{classifier_forward.25} parent=0 // pred_region
    %19 = vst [vmem:[#allocation2] sm:$0xff] 0.0
  $region17: #{classifier_forward.25} parent=0 // pred_fallthru
    _
  %v20 = vld [vmem:[#allocation2] sm:$0xff]
  %v21 = vld [vmem:[%s0] sm:$0xf]
  %v22 = vld [vmem:[%s1] sm:$0xf]
  %v23 = vld [vmem:[%s1 + $0x4] sm:$0xf]
  %v24 = vld [vmem:[%s1 + $0x8] sm:$0xf]
  %v25 = vld [vmem:[%s1 + $0xc] sm:$0xf]
  %v26 = vld [vmem:[%s1 + $0x10] sm:$0xf]
  %v27 = vld [vmem:[%s1 + $0x14] sm:$0xf]
  %v28 = vld [vmem:[%s1 + $0x18] sm:$0xf]
  %v29 = vld [vmem:[%s1 + $0x1c] sm:$0xf]
  %v30 = vld [vmem:[%s1 + $0x20] sm:$0xf]
  %v31 = vld [vmem:[%s1 + $0x24] sm:$0xf]
  %v32 = vld [vmem:[%s1 + $0x28] sm:$0xf]
  %v33 = vld [vmem:[%s1 + $0x2c] sm:$0xf]
  %v34 = vld [vmem:[%s1 + $0x30] sm:$0xf]
  %v35 = vld [vmem:[%s1 + $0x34] sm:$0xf]
  %v36 = vld [vmem:[%s1 + $0x38] sm:$0xf]
  %v37 = vld [vmem:[%s1 + $0x3c] sm:$0xf]
  %v54 = vunpack.c.l.b16 %v22
  %v55 = vunpack.c.l.b16 %v23
  %v56 = vunpack.c.l.b16 %v24
  %v57 = vunpack.c.l.b16 %v25
  %v58 = vunpack.c.l.b16 %v26
  %v59 = vunpack.c.l.b16 %v27
  %v60 = vunpack.c.l.b16 %v28
  %v61 = vunpack.c.l.b16 %v29
  %v62 = vunpack.c.l.b16 %v30
  %v63 = vunpack.c.l.b16 %v31
  %v64 = vunpack.c.l.b16 %v32
  %v65 = vunpack.c.l.b16 %v33
  %v66 = vunpack.c.l.b16 %v34
  %v67 = vunpack.c.l.b16 %v35
  %v68 = vunpack.c.l.b16 %v36
  %v69 = vunpack.c.l.b16 %v37
  %v70 = vpack.c.b16 %v55, %v54
  %v71 = vpack.c.b16 %v57, %v56
  %v72 = vpack.c.b16 %v59, %v58
  %v73 = vpack.c.b16 %v61, %v60
  %v74 = vpack.c.b16 %v63, %v62
  %v75 = vpack.c.b16 %v65, %v64
  %v76 = vpack.c.b16 %v67, %v66
  %v77 = vpack.c.b16 %v69, %v68
  %86 = vmatprep.subr.bf16.mxu0 0
  %87 = vmatpush1.bf16.msra.mxu0 %v77
  %88 = vmatprep.subr.bf16.mxu0 0
  %89 = vmatpush1.bf16.msra.mxu0 %v76
  %90 = vmatprep.subr.bf16.mxu0 0
  %91 = vmatpush1.bf16.msra.mxu0 %v75
  %92 = vmatprep.subr.bf16.mxu0 0
  %93 = vmatpush1.bf16.msra.mxu0 %v74
  %94 = vmatprep.subr.bf16.mxu0 0
  %95 = vmatpush1.bf16.msra.mxu0 %v73
  %96 = vmatprep.subr.bf16.mxu0 0
  %97 = vmatpush1.bf16.msra.mxu0 %v72
  %98 = vmatprep.subr.bf16.mxu0 0
  %99 = vmatpush1.bf16.msra.mxu0 %v71
  %100 = vmatprep.subr.bf16.mxu0 0
  %101 = vmatpush1.bf16.msra.mxu0 %v70
  %102 = vmatprep.subr.bf16.mxu0 0
  %103 = vmatpush2.bf16.msra.mxu0 0
  %104 = vmatprep.subr.bf16.mxu0 0
  %105 = vmatpush2.bf16.msra.mxu0 0
  %106 = vmatprep.subr.bf16.mxu0 0
  %107 = vmatpush2.bf16.msra.mxu0 0
  %108 = vmatprep.subr.bf16.mxu0 0
  %109 = vmatpush2.bf16.msra.mxu0 0
  %110 = vmatprep.subr.bf16.mxu0 0
  %111 = vmatpush2.bf16.msra.mxu0 0
  %112 = vmatprep.subr.bf16.mxu0 0
  %113 = vmatpush2.bf16.msra.mxu0 0
  %114 = vmatprep.subr.bf16.mxu0 0
  %115 = vmatpush2.bf16.msra.mxu0 0
  %116 = vmatprep.subr.bf16.mxu0 0
  %117 = vmatpush2.bf16.msra.mxu0 0
  %118 = vmatprep.mubr.bf16.mxu0 0
  %119 = vmatmul.mubr.bf16.gmra.mxu0 %v21
  %v120 = vpop.f32.mrf.mxu0
  %v121 = vadd.f32 0.0, %v120
  %v122 = vpop.f32.mrf.mxu0
  %v123 = vpop.f32.mrf.mxu0
  %v124 = vpop.f32.mrf.mxu0
  %125 = vdwg.mxu0
  %v126 = vadd.f32 %v20, %v121
  %127 = vst [vmem:[#allocation2] sm:$0xff] %v126
  // Predicated region
  $region18: #{classifier_forward.25} parent=0 // pred_check
    %p128 = pneg %p15
  $region19: #{classifier_forward.25} parent=0 // pred_check_branch
    %130 = sbr.rel (%p128) target = $region21
  $region20: #{classifier_forward.25} parent=0 // pred_region
    %v131 = vld [vmem:[#allocation2] sm:$0xff]
    %v132 = vld [vmem:[%s2] sm:$0x1]
    %v134 = vlaneseq
    %v135 = vshrl.u32 %v134, 7
    %v136 = vsub.s32 0, %v135
    %v137 = vrot.slane %v132, %v136
    %v139 = vadd.f32 %v131, %v137
    %140 = vst [vmem:[%s3] sm:$0xff] %v139
  $region21: #{classifier_forward.25} parent=0 // pred_fallthru
    _
  // Predicated region
  $region22: #{classifier_forward.25} parent=0 // pred_check
    _
  $region23: #{classifier_forward.25} parent=0 // pred_check_branch
    %142 = sbr.rel (0) target = $region25
  $region24: #{classifier_forward.25} parent=0 // pred_region
    _
  $region25: #{classifier_forward.25} parent=0 // pred_fallthru
    _
  // Predicated region
  $region26: #{classifier_forward.25} parent=0 // pred_check
    _
  $region27: #{classifier_forward.25} parent=0 // pred_check_branch
    %144 = sbr.rel (0) target = $region29
  $region28: #{classifier_forward.25} parent=0 // pred_region
    _
  $region29: #{classifier_forward.25} parent=0 // pred_fallthru
    _

</llo_original>
